<compile_context>
chip_gen: v7x
topology: tpu7x:2x2x1
jax: 0.10.0
libtpu: 0.0.40
codegen_flags: <defaults>
</compile_context>

<pallas_src>
import functools
import math

import jax
import jax.numpy as jnp
from jax.experimental import pallas as pl
from jax.experimental.pallas import tpu as pltpu

ACT_DTYPE = jnp.bfloat16      # inter-layer activation storage dtype (HBM)
WEIGHT_DTYPE = jnp.bfloat16   # encoder matmul weight storage dtype (HBM)


def _pick_tile(dim, desired, align):
    """Block size for `dim`: the full dim if dim <= desired, else the largest
    multiple of `align` (<= desired) that divides dim; falls back to the full dim
    (always a legal block) when no aligned divisor exists."""
    if dim <= desired:
        return dim
    t = (desired // align) * align
    while t >= align:
        if dim % t == 0:
            return t
        t -= align
    return dim


# ----------------------------- dense (matmul + bias + act) ------------------ #

def _dense_kernel(x_ref, w_ref, b_ref, o_ref, acc_ref, *, activation):
    @pl.when(pl.program_id(2) == 0)
    def _():
        acc_ref[...] = jnp.zeros_like(acc_ref)

    acc_ref[...] += jnp.dot(x_ref[...], w_ref[...],
                            preferred_element_type=jnp.float32)

    @pl.when(pl.program_id(2) == pl.num_programs(2) - 1)
    def _():
        y = acc_ref[...] + b_ref[...].astype(jnp.float32)
        if activation == "gelu":
            # tanh approximation of GELU (f32 elementwise math)
            y = 0.5 * y * (1.0 + jnp.tanh(0.7978845608028654
                                          * (y + 0.044715 * y * y * y)))
        elif activation == "tanh":
            y = jnp.tanh(y)
        o_ref[...] = y.astype(o_ref.dtype)


def dense(x, w, b, activation="none", out_dtype=None, tm=512, tn=256, tk=512):
    """x: (M, K) @ w: (K, N) + b: (N,) -> (M, N), optional fused activation."""
    M, K = x.shape
    N = w.shape[1]
    out_dtype = x.dtype if out_dtype is None else out_dtype
    tm = _pick_tile(M, tm, 8)
    tn = _pick_tile(N, tn, 128)
    tk = _pick_tile(K, tk, 128)
    grid = (M // tm, N // tn, K // tk)
    bytes_accessed = int(x.dtype.itemsize * M * K + w.dtype.itemsize * K * N
                         + jnp.dtype(out_dtype).itemsize * M * N + 4 * N)
    return pl.pallas_call(
        functools.partial(_dense_kernel, activation=activation),
        out_shape=jax.ShapeDtypeStruct((M, N), out_dtype),
        grid=grid,
        in_specs=[
            pl.BlockSpec((tm, tk), lambda i, j, k: (i, k)),
            pl.BlockSpec((tk, tn), lambda i, j, k: (k, j)),
            pl.BlockSpec((1, tn), lambda i, j, k: (0, j)),
        ],
        out_specs=pl.BlockSpec((tm, tn), lambda i, j, k: (i, j)),
        scratch_shapes=[pltpu.VMEM((tm, tn), jnp.float32)],
        compiler_params=pltpu.CompilerParams(
            dimension_semantics=("parallel", "parallel", "arbitrary")),
        cost_estimate=pl.CostEstimate(
            flops=2 * M * N * K,
            transcendentals=M * N if activation in ("gelu", "tanh") else 0,
            bytes_accessed=bytes_accessed),
    )(x, w, b.reshape(1, N))


# -------------- dense + bias + residual + LayerNorm (fused epilogue) -------- #

def _dense_add_ln_kernel(x_ref, w_ref, b_ref, r_ref, g_ref, be_ref, o_ref, acc_ref,
                         *, eps):
    @pl.when(pl.program_id(1) == 0)
    def _():
        acc_ref[...] = jnp.zeros_like(acc_ref)

    acc_ref[...] += jnp.dot(x_ref[...], w_ref[...],
                            preferred_element_type=jnp.float32)

    @pl.when(pl.program_id(1) == pl.num_programs(1) - 1)
    def _():
        h = (acc_ref[...] + b_ref[...].astype(jnp.float32)
             + r_ref[...].astype(jnp.float32))
        mean = jnp.mean(h, axis=-1, keepdims=True)
        var = jnp.mean(jnp.square(h - mean), axis=-1, keepdims=True)
        n = (h - mean) * jax.lax.rsqrt(var + eps)
        o_ref[...] = (n * g_ref[...] + be_ref[...]).astype(o_ref.dtype)


def dense_add_layernorm(x, w, b, residual, gamma, beta, eps=1e-12,
                        out_dtype=None, tm=512, tk=512):
    """LayerNorm((x @ w + b) + residual). Output covers full N so LN fuses in epilogue."""
    M, K = x.shape
    N = w.shape[1]
    out_dtype = x.dtype if out_dtype is None else out_dtype
    tm = _pick_tile(M, tm, 8)
    tk = _pick_tile(K, tk, 128)
    grid = (M // tm, K // tk)
    bytes_accessed = int(x.dtype.itemsize * M * K + w.dtype.itemsize * K * N
                         + residual.dtype.itemsize * M * N
                         + jnp.dtype(out_dtype).itemsize * M * N + 12 * N)
    return pl.pallas_call(
        functools.partial(_dense_add_ln_kernel, eps=eps),
        out_shape=jax.ShapeDtypeStruct((M, N), out_dtype),
        grid=grid,
        in_specs=[
            pl.BlockSpec((tm, tk), lambda i, k: (i, k)),
            pl.BlockSpec((tk, N), lambda i, k: (k, 0)),
            pl.BlockSpec((1, N), lambda i, k: (0, 0)),
            pl.BlockSpec((tm, N), lambda i, k: (i, 0)),
            pl.BlockSpec((1, N), lambda i, k: (0, 0)),
            pl.BlockSpec((1, N), lambda i, k: (0, 0)),
        ],
        out_specs=pl.BlockSpec((tm, N), lambda i, k: (i, 0)),
        scratch_shapes=[pltpu.VMEM((tm, N), jnp.float32)],
        compiler_params=pltpu.CompilerParams(
            dimension_semantics=("parallel", "arbitrary")),
        cost_estimate=pl.CostEstimate(
            flops=2 * M * N * K,
            transcendentals=M,
            bytes_accessed=bytes_accessed),
    )(x, w, b.reshape(1, N), residual, gamma.reshape(1, N), beta.reshape(1, N))


# -------------------------------- LayerNorm --------------------------------- #

def _layernorm_kernel(x_ref, g_ref, b_ref, o_ref, *, eps):
    h = x_ref[...].astype(jnp.float32)
    mean = jnp.mean(h, axis=-1, keepdims=True)
    var = jnp.mean(jnp.square(h - mean), axis=-1, keepdims=True)
    n = (h - mean) * jax.lax.rsqrt(var + eps)
    o_ref[...] = (n * g_ref[...] + b_ref[...]).astype(o_ref.dtype)


def layer_norm(x, gamma, beta, eps=1e-12, out_dtype=None, tm=512):
    """Row-tiled LayerNorm over the last dim (no residual input)."""
    M, H = x.shape
    out_dtype = x.dtype if out_dtype is None else out_dtype
    tm = _pick_tile(M, tm, 8)
    grid = (M // tm,)
    return pl.pallas_call(
        functools.partial(_layernorm_kernel, eps=eps),
        out_shape=jax.ShapeDtypeStruct((M, H), out_dtype),
        grid=grid,
        in_specs=[pl.BlockSpec((tm, H), lambda i: (i, 0)),
                  pl.BlockSpec((1, H), lambda i: (0, 0)),
                  pl.BlockSpec((1, H), lambda i: (0, 0))],
        out_specs=pl.BlockSpec((tm, H), lambda i: (i, 0)),
        compiler_params=pltpu.CompilerParams(dimension_semantics=("parallel",)),
    )(x, gamma.reshape(1, H), beta.reshape(1, H))


# -------------------------------- attention ---------------------------------- #

def _attn_head(q, k, v, bias, scale, out_dtype):
    """One head of scaled-dot-product attention; all math in f32, MXU ops in input dtype."""
    s = jax.lax.dot_general(q, k, (((1,), (1,)), ((), ())),
                            preferred_element_type=jnp.float32) * scale + bias
    s = s - jnp.max(s, axis=-1, keepdims=True)
    p = jnp.exp(s)
    p = p * pl.reciprocal(jnp.sum(p, axis=-1, keepdims=True), approx=True)
    ctx = jnp.dot(p.astype(v.dtype), v, preferred_element_type=jnp.float32)
    return ctx.astype(out_dtype)


def _attention_blocked_kernel(q_ref, k_ref, v_ref, m_ref, o_ref, *,
                              heads_in_block, head_dim, scale):
    """128-lane Q/K/V head-block per program; per-head context written straight to o_ref."""
    bias = m_ref[0]                                   # (1, S) additive mask, f32
    for i in range(heads_in_block):
        sl = slice(i * head_dim, (i + 1) * head_dim)
        o_ref[:, sl] = _attn_head(q_ref[:, sl], k_ref[:, sl], v_ref[:, sl],
                                  bias, scale, o_ref.dtype)


def _attention_small_kernel(qkv_ref, m_ref, o_ref, *, num_heads, head_dim, scale):
    """Fallback: one (S, 3H) slab per batch program (small / non-128-aligned hidden)."""
    qkv = qkv_ref[...]                                # (S, 3H)
    H = num_heads * head_dim
    bias = m_ref[0]                                   # (1, S)
    for h in range(num_heads):
        q = qkv[:, h * head_dim:(h + 1) * head_dim]
        k = qkv[:, H + h * head_dim:H + (h + 1) * head_dim]
        v = qkv[:, 2 * H + h * head_dim:2 * H + (h + 1) * head_dim]
        o_ref[:, h * head_dim:(h + 1) * head_dim] = _attn_head(
            q, k, v, bias, scale, o_ref.dtype)


def attention(qkv, mask_bias, num_heads, B, S):
    """qkv: (B*S, 3H) fused projection; mask_bias: (B, 1, S) additive (0 / -1e9).
    Returns context (B*S, H) with heads concatenated (lane-dense output slab)."""
    threeH = qkv.shape[1]
    H = threeH // 3
    Dh = H // num_heads
    scale = 1.0 / math.sqrt(Dh)
    itemsize = qkv.dtype.itemsize
    cost = pl.CostEstimate(
        flops=4 * B * num_heads * S * S * Dh,
        transcendentals=B * num_heads * S * S,
        bytes_accessed=int(itemsize * (B * S * threeH + B * S * H) + 4 * B * S))

    BH = 128  # lane-aligned head-block width
    if H % BH == 0 and BH % Dh == 0 and S % 8 == 0:
        # Head-blocked path: grid over (batch, head-block of 128 lanes).
        hb = BH // Dh            # heads per block
        nhb = H // BH            # head blocks (also column-block offset of K, 2*nhb for V)
        return pl.pallas_call(
            functools.partial(_attention_blocked_kernel, heads_in_block=hb,
                              head_dim=Dh, scale=scale),
            out_shape=jax.ShapeDtypeStruct((B * S, H), qkv.dtype),
            grid=(B, nhb),
            in_specs=[
                pl.BlockSpec((S, BH), lambda b, h: (b, h)),              # Q columns
                pl.BlockSpec((S, BH), lambda b, h: (b, h + nhb)),        # K columns
                pl.BlockSpec((S, BH), lambda b, h: (b, h + 2 * nhb)),    # V columns
                pl.BlockSpec((1, 1, S), lambda b, h: (b, 0, 0)),
            ],
            out_specs=pl.BlockSpec((S, BH), lambda b, h: (b, h)),
            compiler_params=pltpu.CompilerParams(
                dimension_semantics=("parallel", "parallel")),
            cost_estimate=cost,
        )(qkv, qkv, qkv, mask_bias)

    # Fallback for small / non-aligned hidden sizes (e.g. the tiny test config).
    return pl.pallas_call(
        functools.partial(_attention_small_kernel, num_heads=num_heads,
                          head_dim=Dh, scale=scale),
        out_shape=jax.ShapeDtypeStruct((B * S, H), qkv.dtype),
        grid=(B,),
        in_specs=[pl.BlockSpec((S, threeH), lambda b: (b, 0)),
                  pl.BlockSpec((1, 1, S), lambda b: (b, 0, 0))],
        out_specs=pl.BlockSpec((S, H), lambda b: (b, 0)),
        compiler_params=pltpu.CompilerParams(dimension_semantics=("parallel",)),
        cost_estimate=cost,
    )(qkv, mask_bias)


# --------------------------- BERT forward (glue) ----------------------------- #

def bert_keyword_extraction_forward(params, input_ids, attention_mask, num_heads):
    B, S = input_ids.shape
    H = params["word_emb"].shape[1]

    # Embeddings (gather in XLA glue), then LayerNorm in Pallas; output stored bf16.
    word = jnp.take(params["word_emb"], input_ids, axis=0)         # (B, S, H)
    pos = params["pos_emb"][:S][None, :, :]                        # (1, S, H)
    tok = params["type_emb"][0][None, None, :]                     # token_type_ids == 0
    emb = (word + pos + tok).reshape(B * S, H)
    x = layer_norm(emb, params["emb_ln_g"], params["emb_ln_b"], out_dtype=ACT_DTYPE)

    # Small (B, 1, S) additive mask; broadcast happens inside the attention kernel.
    mask_bias = ((1.0 - attention_mask.astype(jnp.float32)) * -1e9).reshape(B, 1, S)

    for layer in params["layers"]:
        qkv = dense(x, layer["w_qkv"], layer["b_qkv"])             # fused QKV (B*S, 3H)
        ctx = attention(qkv, mask_bias, num_heads, B, S)           # (B*S, H)
        x = dense_add_layernorm(ctx, layer["wo"], layer["bo"], x,
                                layer["ln1_g"], layer["ln1_b"])
        h = dense(x, layer["w1"], layer["b1"], activation="gelu")
        x = dense_add_layernorm(h, layer["w2"], layer["b2"], x,
                                layer["ln2_g"], layer["ln2_b"])

    # Pooler + classifier heads: tiny (M=B, N<=H) matmuls -> plain XLA in f32
    # (Pallas grid/DMA overhead and masked narrow stores dominate these FLOPs).
    cls = x.reshape(B, S, H)[:, 0, :].astype(jnp.float32)
    pooled = jnp.tanh(cls @ params["pool_w"] + params["pool_b"])   # == BertModel outputs[1]
    # nn.Dropout(p=0.4) -> identity at inference.
    item_logits = pooled @ params["item_w"] + params["item_b"]
    type_logits = pooled @ params["type_w"] + params["type_b"]
    return item_logits, type_logits


# ------------------------------ parameter init ------------------------------- #

def init_params(key, *, vocab_size, max_pos, hidden, num_layers, intermediate,
                num_labels_item, num_labels_type):
    keys = iter(jax.random.split(key, 8 + num_layers * 12))

    def w(shape, dtype=jnp.float32):
        return (jax.random.normal(next(keys), shape, jnp.float32) * 0.02).astype(dtype)

    params = {
        "word_emb": w((vocab_size, hidden)),
        "pos_emb": w((max_pos, hidden)),
        "type_emb": w((2, hidden)),
        "emb_ln_g": jnp.ones((hidden,), jnp.float32),
        "emb_ln_b": jnp.zeros((hidden,), jnp.float32),
        "layers": [],
        # Pooler / classifier heads stay f32 (computed in XLA).
        "pool_w": w((hidden, hidden)),
        "pool_b": jnp.zeros((hidden,), jnp.float32),
        "item_w": w((hidden, num_labels_item)),
        "item_b": jnp.zeros((num_labels_item,), jnp.float32),
        "type_w": w((hidden, num_labels_type)),
        "type_b": jnp.zeros((num_labels_type,), jnp.float32),
    }
    for _ in range(num_layers):
        params["layers"].append({
            # Encoder matmul weights stored bf16 in HBM; biases / LN params f32.
            "w_qkv": w((hidden, 3 * hidden), WEIGHT_DTYPE),
            "b_qkv": jnp.zeros((3 * hidden,), jnp.float32),
            "wo": w((hidden, hidden), WEIGHT_DTYPE),
            "bo": jnp.zeros((hidden,), jnp.float32),
            "ln1_g": jnp.ones((hidden,), jnp.float32),
            "ln1_b": jnp.zeros((hidden,), jnp.float32),
            "w1": w((hidden, intermediate), WEIGHT_DTYPE),
            "b1": jnp.zeros((intermediate,), jnp.float32),
            "w2": w((intermediate, hidden), WEIGHT_DTYPE),
            "b2": jnp.zeros((hidden,), jnp.float32),
            "ln2_g": jnp.ones((hidden,), jnp.float32),
            "ln2_b": jnp.zeros((hidden,), jnp.float32),
        })
    return params


# ----------------------------------- main ------------------------------------ #

if __name__ == "__main__":
    B, S = 2, 8
    HIDDEN, NUM_HEADS, NUM_LAYERS, INTERMEDIATE = 32, 2, 2, 64
    VOCAB, MAX_POS = 100, 16
    NUM_LABELS_ITEM, NUM_LABELS_TYPE = 5, 3

    root = jax.random.PRNGKey(0)
    k_params, k_ids = jax.random.split(root)

    params = init_params(
        k_params, vocab_size=VOCAB, max_pos=MAX_POS, hidden=HIDDEN,
        num_layers=NUM_LAYERS, intermediate=INTERMEDIATE,
        num_labels_item=NUM_LABELS_ITEM, num_labels_type=NUM_LABELS_TYPE)

    input_ids = jax.random.randint(k_ids, (B, S), 0, VOCAB, dtype=jnp.int32)
    attention_mask = jnp.ones((B, S), jnp.int32).at[1, 6:].set(0)  # pad tail of batch 1

    fwd = jax.jit(bert_keyword_extraction_forward, static_argnums=(3,))
    item_logits, type_logits = fwd(params, input_ids, attention_mask, NUM_HEADS)
    jax.block_until_ready((item_logits, type_logits))

    assert item_logits.shape == (B, NUM_LABELS_ITEM)
    assert type_logits.shape == (B, NUM_LABELS_TYPE)
    assert bool(jnp.all(jnp.isfinite(item_logits))) and bool(jnp.all(jnp.isfinite(type_logits)))
    print("KERNEL_OK")
</pallas_src>

<mosaic_0001>
module attributes {stable_mosaic.version = 11 : i64} {
  func.func @_layernorm_kernel(%arg0: i32, %arg1: memref<16x32xf32, #tpu.memory_space<vmem>>, %arg2: memref<1x32xf32, #tpu.memory_space<vmem>>, %arg3: memref<1x32xf32, #tpu.memory_space<vmem>>, %arg4: memref<16x32xbf16, #tpu.memory_space<vmem>>) attributes {dimension_semantics = [#tpu.dimension_semantics<parallel>], iteration_bounds = array<i64: 1>, scalar_prefetch = 0 : i64, scratch_operands = 0 : i64, tpu.core_type = #tpu.core_type<tc>, window_params = [{transform_indices = @transform_0, window_bounds = array<i64: 16, 32>}, {pipeline_mode = #tpu.pipeline_mode<synchronous>, transform_indices = @transform_1, window_bounds = array<i64: 1, 32>}, {pipeline_mode = #tpu.pipeline_mode<synchronous>, transform_indices = @transform_2, window_bounds = array<i64: 1, 32>}, {transform_indices = @transform_3, window_bounds = array<i64: 16, 32>}]} {
    %c0 = arith.constant 0 : index
    %c0_0 = arith.constant 0 : index
    %0 = vector.load %arg1[%c0, %c0_0] : memref<16x32xf32, #tpu.memory_space<vmem>>, vector<16x32xf32>
    %cst = arith.constant dense<0.000000e+00> : vector<16xf32>
    %1 = vector.multi_reduction <add>, %0, %cst [1] : vector<16x32xf32> to vector<16xf32>
    %2 = vector.shape_cast %1 : vector<16xf32> to vector<16x1xf32>
    %cst_1 = arith.constant 3.200000e+01 : f32
    %3 = vector.broadcast %cst_1 : f32 to vector<16x1xf32>
    %4 = arith.divf %2, %3 : vector<16x1xf32>
    %5 = vector.broadcast %4 : vector<16x1xf32> to vector<16x32xf32>
    %6 = arith.subf %0, %5 : vector<16x32xf32>
    %7 = arith.mulf %6, %6 : vector<16x32xf32>
    %cst_2 = arith.constant dense<0.000000e+00> : vector<16xf32>
    %8 = vector.multi_reduction <add>, %7, %cst_2 [1] : vector<16x32xf32> to vector<16xf32>
    %9 = vector.shape_cast %8 : vector<16xf32> to vector<16x1xf32>
    %cst_3 = arith.constant 3.200000e+01 : f32
    %10 = vector.broadcast %cst_3 : f32 to vector<16x1xf32>
    %11 = arith.divf %9, %10 : vector<16x1xf32>
    %12 = vector.broadcast %4 : vector<16x1xf32> to vector<16x32xf32>
    %13 = arith.subf %0, %12 : vector<16x32xf32>
    %cst_4 = arith.constant 9.99999996E-13 : f32
    %14 = vector.broadcast %cst_4 : f32 to vector<16x1xf32>
    %15 = arith.addf %11, %14 : vector<16x1xf32>
    %16 = math.rsqrt %15 : vector<16x1xf32>
    %17 = vector.broadcast %16 : vector<16x1xf32> to vector<16x32xf32>
    %18 = arith.mulf %13, %17 : vector<16x32xf32>
    %c0_5 = arith.constant 0 : index
    %c0_6 = arith.constant 0 : index
    %19 = vector.load %arg2[%c0_5, %c0_6] : memref<1x32xf32, #tpu.memory_space<vmem>>, vector<1x32xf32>
    %20 = vector.broadcast %19 : vector<1x32xf32> to vector<16x32xf32>
    %21 = arith.mulf %18, %20 : vector<16x32xf32>
    %c0_7 = arith.constant 0 : index
    %c0_8 = arith.constant 0 : index
    %22 = vector.load %arg3[%c0_7, %c0_8] : memref<1x32xf32, #tpu.memory_space<vmem>>, vector<1x32xf32>
    %23 = vector.broadcast %22 : vector<1x32xf32> to vector<16x32xf32>
    %24 = arith.addf %21, %23 : vector<16x32xf32>
    %25 = arith.truncf %24 : vector<16x32xf32> to vector<16x32xbf16>
    %c0_9 = arith.constant 0 : index
    %c0_10 = arith.constant 0 : index
    %26 = vector.load %arg4[%c0_9, %c0_10] : memref<16x32xbf16, #tpu.memory_space<vmem>>, vector<16x32xbf16>
    tpu.vector_store %arg4[%c0_9, %c0_10], %25 {strides = array<i32>} : memref<16x32xbf16, #tpu.memory_space<vmem>>, vector<16x32xbf16>,
    return
  }
  func.func @transform_0(%arg0: i32) -> (i32, i32) {
    %c0_i32 = arith.constant 0 : i32
    %c0_i32_0 = arith.constant 0 : i32
    return %arg0, %c0_i32 : i32, i32
  }
  func.func @transform_1(%arg0: i32) -> (i32, i32) {
    %c0_i32 = arith.constant 0 : i32
    %c0_i32_0 = arith.constant 0 : i32
    %c0_i32_1 = arith.constant 0 : i32
    return %c0_i32, %c0_i32_0 : i32, i32
  }
  func.func @transform_2(%arg0: i32) -> (i32, i32) {
    %c0_i32 = arith.constant 0 : i32
    %c0_i32_0 = arith.constant 0 : i32
    %c0_i32_1 = arith.constant 0 : i32
    return %c0_i32, %c0_i32_0 : i32, i32
  }
  func.func @transform_3(%arg0: i32) -> (i32, i32) {
    %c0_i32 = arith.constant 0 : i32
    %c0_i32_0 = arith.constant 0 : i32
    return %arg0, %c0_i32 : i32, i32
  }
}

module attributes {stable_mosaic.version = 11 : i64} {
  func.func @_dense_kernel(%arg0: i32, %arg1: i32, %arg2: i32, %arg3: memref<16x32xbf16, #tpu.memory_space<vmem>>, %arg4: memref<32x96xbf16, #tpu.memory_space<vmem>>, %arg5: memref<1x96xf32, #tpu.memory_space<vmem>>, %arg6: memref<16x96xbf16, #tpu.memory_space<vmem>>, %arg7: memref<16x96xf32, #tpu.memory_space<vmem>>) attributes {dimension_semantics = [#tpu.dimension_semantics<parallel>, #tpu.dimension_semantics<parallel>, #tpu.dimension_semantics<arbitrary>], iteration_bounds = array<i64: 1, 1, 1>, scalar_prefetch = 0 : i64, scratch_operands = 1 : i64, tpu.core_type = #tpu.core_type<tc>, window_params = [{transform_indices = @transform_0, window_bounds = array<i64: 16, 32>}, {transform_indices = @transform_1, window_bounds = array<i64: 32, 96>}, {transform_indices = @transform_2, window_bounds = array<i64: 1, 96>}, {transform_indices = @transform_3, window_bounds = array<i64: 16, 96>}]} {
    %c0_i32 = arith.constant 0 : i32
    %0 = arith.cmpi eq, %arg2, %c0_i32 : i32
    %1 = arith.extui %0 : i1 to i32
    %c0_i32_0 = arith.constant 0 : i32
    %2 = arith.cmpi ne, %1, %c0_i32_0 : i32
    scf.if %2 {
      %cst_10 = arith.constant 0.000000e+00 : f32
      %12 = vector.broadcast %cst_10 : f32 to vector<16x96xf32>
      %c0_11 = arith.constant 0 : index
      %c0_12 = arith.constant 0 : index
      %13 = vector.load %arg7[%c0_11, %c0_12] : memref<16x96xf32, #tpu.memory_space<vmem>>, vector<16x96xf32>
      tpu.vector_store %arg7[%c0_11, %c0_12], %12 {strides = array<i32>} : memref<16x96xf32, #tpu.memory_space<vmem>>, vector<16x96xf32>,
    } else {
    }
    %c0 = arith.constant 0 : index
    %c0_1 = arith.constant 0 : index
    %3 = vector.load %arg7[%c0, %c0_1] : memref<16x96xf32, #tpu.memory_space<vmem>>, vector<16x96xf32>
    %c0_2 = arith.constant 0 : index
    %c0_3 = arith.constant 0 : index
    %4 = vector.load %arg3[%c0_2, %c0_3] : memref<16x32xbf16, #tpu.memory_space<vmem>>, vector<16x32xbf16>
    %c0_4 = arith.constant 0 : index
    %c0_5 = arith.constant 0 : index
    %5 = vector.load %arg4[%c0_4, %c0_5] : memref<32x96xbf16, #tpu.memory_space<vmem>>, vector<32x96xbf16>
    %cst = arith.constant dense<0.000000e+00> : vector<16x96xf32>
    %6 = tpu.matmul %4, %5, %cst {dimension_numbers = #tpu.dot_dimension_numbers<[1], [0], [0], [1], [0, 0, 1, 1], [], []>} : vector<16x32xbf16>, vector<32x96xbf16>, vector<16x96xf32> -> vector<16x96xf32>
    %7 = arith.addf %3, %6 : vector<16x96xf32>
    %c0_6 = arith.constant 0 : index
    %c0_7 = arith.constant 0 : index
    %8 = vector.load %arg7[%c0_6, %c0_7] : memref<16x96xf32, #tpu.memory_space<vmem>>, vector<16x96xf32>
    tpu.vector_store %arg7[%c0_6, %c0_7], %7 {strides = array<i32>} : memref<16x96xf32, #tpu.memory_space<vmem>>, vector<16x96xf32>,
    %c0_i32_8 = arith.constant 0 : i32
    %9 = arith.cmpi eq, %arg2, %c0_i32_8 : i32
    %10 = arith.extui %9 : i1 to i32
    %c0_i32_9 = arith.constant 0 : i32
    %11 = arith.cmpi ne, %10, %c0_i32_9 : i32
    scf.if %11 {
      %c0_10 = arith.constant 0 : index
      %c0_11 = arith.constant 0 : index
      %12 = vector.load %arg7[%c0_10, %c0_11] : memref<16x96xf32, #tpu.memory_space<vmem>>, vector<16x96xf32>
      %c0_12 = arith.constant 0 : index
      %c0_13 = arith.constant 0 : index
      %13 = vector.load %arg5[%c0_12, %c0_13] : memref<1x96xf32, #tpu.memory_space<vmem>>, vector<1x96xf32>
      %14 = vector.broadcast %13 : vector<1x96xf32> to vector<16x96xf32>
      %15 = arith.addf %12, %14 : vector<16x96xf32>
      %16 = arith.truncf %15 : vector<16x96xf32> to vector<16x96xbf16>
      %c0_14 = arith.constant 0 : index
      %c0_15 = arith.constant 0 : index
      %17 = vector.load %arg6[%c0_14, %c0_15] : memref<16x96xbf16, #tpu.memory_space<vmem>>, vector<16x96xbf16>
      tpu.vector_store %arg6[%c0_14, %c0_15], %16 {strides = array<i32>} : memref<16x96xbf16, #tpu.memory_space<vmem>>, vector<16x96xbf16>,
    } else {
    }
    return
  }
  func.func @transform_0(%arg0: i32, %arg1: i32, %arg2: i32) -> (i32, i32) {
    %c0_i32 = arith.constant 0 : i32
    return %arg0, %arg2 : i32, i32
  }
  func.func @transform_1(%arg0: i32, %arg1: i32, %arg2: i32) -> (i32, i32) {
    %c0_i32 = arith.constant 0 : i32
    return %arg2, %arg1 : i32, i32
  }
  func.func @transform_2(%arg0: i32, %arg1: i32, %arg2: i32) -> (i32, i32) {
    %c0_i32 = arith.constant 0 : i32
    %c0_i32_0 = arith.constant 0 : i32
    return %c0_i32, %arg1 : i32, i32
  }
  func.func @transform_3(%arg0: i32, %arg1: i32, %arg2: i32) -> (i32, i32) {
    %c0_i32 = arith.constant 0 : i32
    return %arg0, %arg1 : i32, i32
  }
}

module attributes {stable_mosaic.version = 11 : i64} {
  func.func @_attention_small_kernel(%arg0: i32, %arg1: memref<8x96xbf16, #tpu.memory_space<vmem>>, %arg2: memref<1x1x8xf32, #tpu.memory_space<vmem>>, %arg3: memref<8x32xbf16, #tpu.memory_space<vmem>>) attributes {dimension_semantics = [#tpu.dimension_semantics<parallel>], iteration_bounds = array<i64: 2>, scalar_prefetch = 0 : i64, scratch_operands = 0 : i64, tpu.core_type = #tpu.core_type<tc>, window_params = [{transform_indices = @transform_0, window_bounds = array<i64: 8, 96>}, {transform_indices = @transform_1, window_bounds = array<i64: 1, 1, 8>}, {transform_indices = @transform_2, window_bounds = array<i64: 8, 32>}]} {
    %c0 = arith.constant 0 : index
    %c0_0 = arith.constant 0 : index
    %0 = vector.load %arg1[%c0, %c0_0] : memref<8x96xbf16, #tpu.memory_space<vmem>>, vector<8x96xbf16>
    %c0_1 = arith.constant 0 : index
    %c0_2 = arith.constant 0 : index
    %c0_3 = arith.constant 0 : index
    %1 = vector.load %arg2[%c0_1, %c0_2, %c0_3] : memref<1x1x8xf32, #tpu.memory_space<vmem>>, vector<1x1x8xf32>
    %2 = vector.shape_cast %1 : vector<1x1x8xf32> to vector<1x8xf32>
    %3 = vector.extract_strided_slice %0 {offsets = [0, 0], sizes = [8, 16], strides = [1, 1]} : vector<8x96xbf16> to vector<8x16xbf16>
    %4 = vector.extract_strided_slice %0 {offsets = [0, 32], sizes = [8, 16], strides = [1, 1]} : vector<8x96xbf16> to vector<8x16xbf16>
    %5 = vector.extract_strided_slice %0 {offsets = [0, 64], sizes = [8, 16], strides = [1, 1]} : vector<8x96xbf16> to vector<8x16xbf16>
    %cst = arith.constant dense<0.000000e+00> : vector<8x8xf32>
    %6 = tpu.matmul %3, %4, %cst {dimension_numbers = #tpu.dot_dimension_numbers<[1], [1], [0], [0], [0, 0, 1, 0], [], []>} : vector<8x16xbf16>, vector<8x16xbf16>, vector<8x8xf32> -> vector<8x8xf32>
    %cst_4 = arith.constant 2.500000e-01 : f32
    %7 = vector.broadcast %cst_4 : f32 to vector<8x8xf32>
    %8 = arith.mulf %6, %7 : vector<8x8xf32>
    %9 = vector.broadcast %2 : vector<1x8xf32> to vector<8x8xf32>
    %10 = arith.addf %8, %9 : vector<8x8xf32>
    %cst_5 = arith.constant dense<0xFF800000> : vector<8xf32>
    %11 = vector.multi_reduction <maximumf>, %10, %cst_5 [1] : vector<8x8xf32> to vector<8xf32>
    %12 = vector.shape_cast %11 : vector<8xf32> to vector<8x1xf32>
    %13 = vector.broadcast %12 : vector<8x1xf32> to vector<8x8xf32>
    %14 = arith.subf %10, %13 : vector<8x8xf32>
    %15 = math.exp %14 : vector<8x8xf32>
    %cst_6 = arith.constant dense<0.000000e+00> : vector<8xf32>
    %16 = vector.multi_reduction <add>, %15, %cst_6 [1] : vector<8x8xf32> to vector<8xf32>
    %17 = vector.shape_cast %16 : vector<8xf32> to vector<8x1xf32>
    %18 = tpu.reciprocal %17 {approx = true} : vector<8x1xf32> -> vector<8x1xf32>
    %19 = vector.broadcast %18 : vector<8x1xf32> to vector<8x8xf32>
    %20 = arith.mulf %15, %19 : vector<8x8xf32>
    %21 = arith.truncf %20 : vector<8x8xf32> to vector<8x8xbf16>
    %cst_7 = arith.constant dense<0.000000e+00> : vector<8x16xf32>
    %22 = tpu.matmul %21, %5, %cst_7 {dimension_numbers = #tpu.dot_dimension_numbers<[1], [0], [0], [1], [0, 0, 1, 1], [], []>} : vector<8x8xbf16>, vector<8x16xbf16>, vector<8x16xf32> -> vector<8x16xf32>
    %23 = arith.truncf %22 : vector<8x16xf32> to vector<8x16xbf16>
    %c0_8 = arith.constant 0 : index
    %c0_9 = arith.constant 0 : index
    %24 = vector.load %arg3[%c0_8, %c0_9] : memref<8x32xbf16, #tpu.memory_space<vmem>>, vector<8x16xbf16>
    tpu.vector_store %arg3[%c0_8, %c0_9], %23 {strides = array<i32>} : memref<8x32xbf16, #tpu.memory_space<vmem>>, vector<8x16xbf16>,
    %25 = vector.extract_strided_slice %0 {offsets = [0, 16], sizes = [8, 16], strides = [1, 1]} : vector<8x96xbf16> to vector<8x16xbf16>
    %26 = vector.extract_strided_slice %0 {offsets = [0, 48], sizes = [8, 16], strides = [1, 1]} : vector<8x96xbf16> to vector<8x16xbf16>
    %27 = vector.extract_strided_slice %0 {offsets = [0, 80], sizes = [8, 16], strides = [1, 1]} : vector<8x96xbf16> to vector<8x16xbf16>
    %cst_10 = arith.constant dense<0.000000e+00> : vector<8x8xf32>
    %28 = tpu.matmul %25, %26, %cst_10 {dimension_numbers = #tpu.dot_dimension_numbers<[1], [1], [0], [0], [0, 0, 1, 0], [], []>} : vector<8x16xbf16>, vector<8x16xbf16>, vector<8x8xf32> -> vector<8x8xf32>
    %cst_11 = arith.constant 2.500000e-01 : f32
    %29 = vector.broadcast %cst_11 : f32 to vector<8x8xf32>
    %30 = arith.mulf %28, %29 : vector<8x8xf32>
    %31 = vector.broadcast %2 : vector<1x8xf32> to vector<8x8xf32>
    %32 = arith.addf %30, %31 : vector<8x8xf32>
    %cst_12 = arith.constant dense<0xFF800000> : vector<8xf32>
    %33 = vector.multi_reduction <maximumf>, %32, %cst_12 [1] : vector<8x8xf32> to vector<8xf32>
    %34 = vector.shape_cast %33 : vector<8xf32> to vector<8x1xf32>
    %35 = vector.broadcast %34 : vector<8x1xf32> to vector<8x8xf32>
    %36 = arith.subf %32, %35 : vector<8x8xf32>
    %37 = math.exp %36 : vector<8x8xf32>
    %cst_13 = arith.constant dense<0.000000e+00> : vector<8xf32>
    %38 = vector.multi_reduction <add>, %37, %cst_13 [1] : vector<8x8xf32> to vector<8xf32>
    %39 = vector.shape_cast %38 : vector<8xf32> to vector<8x1xf32>
    %40 = tpu.reciprocal %39 {approx = true} : vector<8x1xf32> -> vector<8x1xf32>
    %41 = vector.broadcast %40 : vector<8x1xf32> to vector<8x8xf32>
    %42 = arith.mulf %37, %41 : vector<8x8xf32>
    %43 = arith.truncf %42 : vector<8x8xf32> to vector<8x8xbf16>
    %cst_14 = arith.constant dense<0.000000e+00> : vector<8x16xf32>
    %44 = tpu.matmul %43, %27, %cst_14 {dimension_numbers = #tpu.dot_dimension_numbers<[1], [0], [0], [1], [0, 0, 1, 1], [], []>} : vector<8x8xbf16>, vector<8x16xbf16>, vector<8x16xf32> -> vector<8x16xf32>
    %45 = arith.truncf %44 : vector<8x16xf32> to vector<8x16xbf16>
    %c0_15 = arith.constant 0 : index
    %c16 = arith.constant 16 : index
    %46 = vector.load %arg3[%c0_15, %c16] : memref<8x32xbf16, #tpu.memory_space<vmem>>, vector<8x16xbf16>
    tpu.vector_store %arg3[%c0_15, %c16], %45 {strides = array<i32>} : memref<8x32xbf16, #tpu.memory_space<vmem>>, vector<8x16xbf16>,
    return
  }
  func.func @transform_0(%arg0: i32) -> (i32, i32) {
    %c0_i32 = arith.constant 0 : i32
    %c0_i32_0 = arith.constant 0 : i32
    return %arg0, %c0_i32 : i32, i32
  }
  func.func @transform_1(%arg0: i32) -> (i32, i32, i32) {
    %c0_i32 = arith.constant 0 : i32
    %c0_i32_0 = arith.constant 0 : i32
    %c0_i32_1 = arith.constant 0 : i32
    return %arg0, %c0_i32, %c0_i32_0 : i32, i32, i32
  }
  func.func @transform_2(%arg0: i32) -> (i32, i32) {
    %c0_i32 = arith.constant 0 : i32
    %c0_i32_0 = arith.constant 0 : i32
    return %arg0, %c0_i32 : i32, i32
  }
}

module attributes {stable_mosaic.version = 11 : i64} {
  func.func @_dense_add_ln_kernel(%arg0: i32, %arg1: i32, %arg2: memref<16x32xbf16, #tpu.memory_space<vmem>>, %arg3: memref<32x32xbf16, #tpu.memory_space<vmem>>, %arg4: memref<1x32xf32, #tpu.memory_space<vmem>>, %arg5: memref<16x32xbf16, #tpu.memory_space<vmem>>, %arg6: memref<1x32xf32, #tpu.memory_space<vmem>>, %arg7: memref<1x32xf32, #tpu.memory_space<vmem>>, %arg8: memref<16x32xbf16, #tpu.memory_space<vmem>>, %arg9: memref<16x32xf32, #tpu.memory_space<vmem>>) attributes {dimension_semantics = [#tpu.dimension_semantics<parallel>, #tpu.dimension_semantics<arbitrary>], iteration_bounds = array<i64: 1, 1>, scalar_prefetch = 0 : i64, scratch_operands = 1 : i64, tpu.core_type = #tpu.core_type<tc>, window_params = [{transform_indices = @transform_0, window_bounds = array<i64: 16, 32>}, {transform_indices = @transform_1, window_bounds = array<i64: 32, 32>}, {pipeline_mode = #tpu.pipeline_mode<synchronous>, transform_indices = @transform_2, window_bounds = array<i64: 1, 32>}, {transform_indices = @transform_3, window_bounds = array<i64: 16, 32>}, {pipeline_mode = #tpu.pipeline_mode<synchronous>, transform_indices = @transform_4, window_bounds = array<i64: 1, 32>}, {pipeline_mode = #tpu.pipeline_mode<synchronous>, transform_indices = @transform_5, window_bounds = array<i64: 1, 32>}, {transform_indices = @transform_6, window_bounds = array<i64: 16, 32>}]} {
    %c0_i32 = arith.constant 0 : i32
    %0 = arith.cmpi eq, %arg1, %c0_i32 : i32
    %1 = arith.extui %0 : i1 to i32
    %c0_i32_0 = arith.constant 0 : i32
    %2 = arith.cmpi ne, %1, %c0_i32_0 : i32
    scf.if %2 {
      %cst_10 = arith.constant 0.000000e+00 : f32
      %12 = vector.broadcast %cst_10 : f32 to vector<16x32xf32>
      %c0_11 = arith.constant 0 : index
      %c0_12 = arith.constant 0 : index
      %13 = vector.load %arg9[%c0_11, %c0_12] : memref<16x32xf32, #tpu.memory_space<vmem>>, vector<16x32xf32>
      tpu.vector_store %arg9[%c0_11, %c0_12], %12 {strides = array<i32>} : memref<16x32xf32, #tpu.memory_space<vmem>>, vector<16x32xf32>,
    } else {
    }
    %c0 = arith.constant 0 : index
    %c0_1 = arith.constant 0 : index
    %3 = vector.load %arg9[%c0, %c0_1] : memref<16x32xf32, #tpu.memory_space<vmem>>, vector<16x32xf32>
    %c0_2 = arith.constant 0 : index
    %c0_3 = arith.constant 0 : index
    %4 = vector.load %arg2[%c0_2, %c0_3] : memref<16x32xbf16, #tpu.memory_space<vmem>>, vector<16x32xbf16>
    %c0_4 = arith.constant 0 : index
    %c0_5 = arith.constant 0 : index
    %5 = vector.load %arg3[%c0_4, %c0_5] : memref<32x32xbf16, #tpu.memory_space<vmem>>, vector<32x32xbf16>
    %cst = arith.constant dense<0.000000e+00> : vector<16x32xf32>
    %6 = tpu.matmul %4, %5, %cst {dimension_numbers = #tpu.dot_dimension_numbers<[1], [0], [0], [1], [0, 0, 1, 1], [], []>} : vector<16x32xbf16>, vector<32x32xbf16>, vector<16x32xf32> -> vector<16x32xf32>
    %7 = arith.addf %3, %6 : vector<16x32xf32>
    %c0_6 = arith.constant 0 : index
    %c0_7 = arith.constant 0 : index
    %8 = vector.load %arg9[%c0_6, %c0_7] : memref<16x32xf32, #tpu.memory_space<vmem>>, vector<16x32xf32>
    tpu.vector_store %arg9[%c0_6, %c0_7], %7 {strides = array<i32>} : memref<16x32xf32, #tpu.memory_space<vmem>>, vector<16x32xf32>,
    %c0_i32_8 = arith.constant 0 : i32
    %9 = arith.cmpi eq, %arg1, %c0_i32_8 : i32
    %10 = arith.extui %9 : i1 to i32
    %c0_i32_9 = arith.constant 0 : i32
    %11 = arith.cmpi ne, %10, %c0_i32_9 : i32
    scf.if %11 {
      %c0_10 = arith.constant 0 : index
      %c0_11 = arith.constant 0 : index
      %12 = vector.load %arg9[%c0_10, %c0_11] : memref<16x32xf32, #tpu.memory_space<vmem>>, vector<16x32xf32>
      %c0_12 = arith.constant 0 : index
      %c0_13 = arith.constant 0 : index
      %13 = vector.load %arg4[%c0_12, %c0_13] : memref<1x32xf32, #tpu.memory_space<vmem>>, vector<1x32xf32>
      %14 = vector.broadcast %13 : vector<1x32xf32> to vector<16x32xf32>
      %15 = arith.addf %12, %14 : vector<16x32xf32>
      %c0_14 = arith.constant 0 : index
      %c0_15 = arith.constant 0 : index
      %16 = vector.load %arg5[%c0_14, %c0_15] : memref<16x32xbf16, #tpu.memory_space<vmem>>, vector<16x32xbf16>
      %17 = arith.extf %16 : vector<16x32xbf16> to vector<16x32xf32>
      %18 = arith.addf %15, %17 : vector<16x32xf32>
      %cst_16 = arith.constant dense<0.000000e+00> : vector<16xf32>
      %19 = vector.multi_reduction <add>, %18, %cst_16 [1] : vector<16x32xf32> to vector<16xf32>
      %20 = vector.shape_cast %19 : vector<16xf32> to vector<16x1xf32>
      %cst_17 = arith.constant 3.200000e+01 : f32
      %21 = vector.broadcast %cst_17 : f32 to vector<16x1xf32>
      %22 = arith.divf %20, %21 : vector<16x1xf32>
      %23 = vector.broadcast %22 : vector<16x1xf32> to vector<16x32xf32>
      %24 = arith.subf %18, %23 : vector<16x32xf32>
      %25 = arith.mulf %24, %24 : vector<16x32xf32>
      %cst_18 = arith.constant dense<0.000000e+00> : vector<16xf32>
      %26 = vector.multi_reduction <add>, %25, %cst_18 [1] : vector<16x32xf32> to vector<16xf32>
      %27 = vector.shape_cast %26 : vector<16xf32> to vector<16x1xf32>
      %cst_19 = arith.constant 3.200000e+01 : f32
      %28 = vector.broadcast %cst_19 : f32 to vector<16x1xf32>
      %29 = arith.divf %27, %28 : vector<16x1xf32>
      %30 = vector.broadcast %22 : vector<16x1xf32> to vector<16x32xf32>
      %31 = arith.subf %18, %30 : vector<16x32xf32>
      %cst_20 = arith.constant 9.99999996E-13 : f32
      %32 = vector.broadcast %cst_20 : f32 to vector<16x1xf32>
      %33 = arith.addf %29, %32 : vector<16x1xf32>
      %34 = math.rsqrt %33 : vector<16x1xf32>
      %35 = vector.broadcast %34 : vector<16x1xf32> to vector<16x32xf32>
      %36 = arith.mulf %31, %35 : vector<16x32xf32>
      %c0_21 = arith.constant 0 : index
      %c0_22 = arith.constant 0 : index
      %37 = vector.load %arg6[%c0_21, %c0_22] : memref<1x32xf32, #tpu.memory_space<vmem>>, vector<1x32xf32>
      %38 = vector.broadcast %37 : vector<1x32xf32> to vector<16x32xf32>
      %39 = arith.mulf %36, %38 : vector<16x32xf32>
      %c0_23 = arith.constant 0 : index
      %c0_24 = arith.constant 0 : index
      %40 = vector.load %arg7[%c0_23, %c0_24] : memref<1x32xf32, #tpu.memory_space<vmem>>, vector<1x32xf32>
      %41 = vector.broadcast %40 : vector<1x32xf32> to vector<16x32xf32>
      %42 = arith.addf %39, %41 : vector<16x32xf32>
      %43 = arith.truncf %42 : vector<16x32xf32> to vector<16x32xbf16>
      %c0_25 = arith.constant 0 : index
      %c0_26 = arith.constant 0 : index
      %44 = vector.load %arg8[%c0_25, %c0_26] : memref<16x32xbf16, #tpu.memory_space<vmem>>, vector<16x32xbf16>
      tpu.vector_store %arg8[%c0_25, %c0_26], %43 {strides = array<i32>} : memref<16x32xbf16, #tpu.memory_space<vmem>>, vector<16x32xbf16>,
    } else {
    }
    return
  }
  func.func @transform_0(%arg0: i32, %arg1: i32) -> (i32, i32) {
    %c0_i32 = arith.constant 0 : i32
    return %arg0, %arg1 : i32, i32
  }
  func.func @transform_1(%arg0: i32, %arg1: i32) -> (i32, i32) {
    %c0_i32 = arith.constant 0 : i32
    %c0_i32_0 = arith.constant 0 : i32
    return %arg1, %c0_i32 : i32, i32
  }
  func.func @transform_2(%arg0: i32, %arg1: i32) -> (i32, i32) {
    %c0_i32 = arith.constant 0 : i32
    %c0_i32_0 = arith.constant 0 : i32
    %c0_i32_1 = arith.constant 0 : i32
    return %c0_i32, %c0_i32_0 : i32, i32
  }
  func.func @transform_3(%arg0: i32, %arg1: i32) -> (i32, i32) {
    %c0_i32 = arith.constant 0 : i32
    %c0_i32_0 = arith.constant 0 : i32
    return %arg0, %c0_i32 : i32, i32
  }
  func.func @transform_4(%arg0: i32, %arg1: i32) -> (i32, i32) {
    %c0_i32 = arith.constant 0 : i32
    %c0_i32_0 = arith.constant 0 : i32
    %c0_i32_1 = arith.constant 0 : i32
    return %c0_i32, %c0_i32_0 : i32, i32
  }
  func.func @transform_5(%arg0: i32, %arg1: i32) -> (i32, i32) {
    %c0_i32 = arith.constant 0 : i32
    %c0_i32_0 = arith.constant 0 : i32
    %c0_i32_1 = arith.constant 0 : i32
    return %c0_i32, %c0_i32_0 : i32, i32
  }
  func.func @transform_6(%arg0: i32, %arg1: i32) -> (i32, i32) {
    %c0_i32 = arith.constant 0 : i32
    %c0_i32_0 = arith.constant 0 : i32
    return %arg0, %c0_i32 : i32, i32
  }
}

module attributes {stable_mosaic.version = 11 : i64} {
  func.func @_dense_kernel(%arg0: i32, %arg1: i32, %arg2: i32, %arg3: memref<16x32xbf16, #tpu.memory_space<vmem>>, %arg4: memref<32x64xbf16, #tpu.memory_space<vmem>>, %arg5: memref<1x64xf32, #tpu.memory_space<vmem>>, %arg6: memref<16x64xbf16, #tpu.memory_space<vmem>>, %arg7: memref<16x64xf32, #tpu.memory_space<vmem>>) attributes {dimension_semantics = [#tpu.dimension_semantics<parallel>, #tpu.dimension_semantics<parallel>, #tpu.dimension_semantics<arbitrary>], iteration_bounds = array<i64: 1, 1, 1>, scalar_prefetch = 0 : i64, scratch_operands = 1 : i64, tpu.core_type = #tpu.core_type<tc>, window_params = [{transform_indices = @transform_0, window_bounds = array<i64: 16, 32>}, {transform_indices = @transform_1, window_bounds = array<i64: 32, 64>}, {transform_indices = @transform_2, window_bounds = array<i64: 1, 64>}, {transform_indices = @transform_3, window_bounds = array<i64: 16, 64>}]} {
    %c0_i32 = arith.constant 0 : i32
    %0 = arith.cmpi eq, %arg2, %c0_i32 : i32
    %1 = arith.extui %0 : i1 to i32
    %c0_i32_0 = arith.constant 0 : i32
    %2 = arith.cmpi ne, %1, %c0_i32_0 : i32
    scf.if %2 {
      %cst_10 = arith.constant 0.000000e+00 : f32
      %12 = vector.broadcast %cst_10 : f32 to vector<16x64xf32>
      %c0_11 = arith.constant 0 : index
      %c0_12 = arith.constant 0 : index
      %13 = vector.load %arg7[%c0_11, %c0_12] : memref<16x64xf32, #tpu.memory_space<vmem>>, vector<16x64xf32>
      tpu.vector_store %arg7[%c0_11, %c0_12], %12 {strides = array<i32>} : memref<16x64xf32, #tpu.memory_space<vmem>>, vector<16x64xf32>,
    } else {
    }
    %c0 = arith.constant 0 : index
    %c0_1 = arith.constant 0 : index
    %3 = vector.load %arg7[%c0, %c0_1] : memref<16x64xf32, #tpu.memory_space<vmem>>, vector<16x64xf32>
    %c0_2 = arith.constant 0 : index
    %c0_3 = arith.constant 0 : index
    %4 = vector.load %arg3[%c0_2, %c0_3] : memref<16x32xbf16, #tpu.memory_space<vmem>>, vector<16x32xbf16>
    %c0_4 = arith.constant 0 : index
    %c0_5 = arith.constant 0 : index
    %5 = vector.load %arg4[%c0_4, %c0_5] : memref<32x64xbf16, #tpu.memory_space<vmem>>, vector<32x64xbf16>
    %cst = arith.constant dense<0.000000e+00> : vector<16x64xf32>
    %6 = tpu.matmul %4, %5, %cst {dimension_numbers = #tpu.dot_dimension_numbers<[1], [0], [0], [1], [0, 0, 1, 1], [], []>} : vector<16x32xbf16>, vector<32x64xbf16>, vector<16x64xf32> -> vector<16x64xf32>
    %7 = arith.addf %3, %6 : vector<16x64xf32>
    %c0_6 = arith.constant 0 : index
    %c0_7 = arith.constant 0 : index
    %8 = vector.load %arg7[%c0_6, %c0_7] : memref<16x64xf32, #tpu.memory_space<vmem>>, vector<16x64xf32>
    tpu.vector_store %arg7[%c0_6, %c0_7], %7 {strides = array<i32>} : memref<16x64xf32, #tpu.memory_space<vmem>>, vector<16x64xf32>,
    %c0_i32_8 = arith.constant 0 : i32
    %9 = arith.cmpi eq, %arg2, %c0_i32_8 : i32
    %10 = arith.extui %9 : i1 to i32
    %c0_i32_9 = arith.constant 0 : i32
    %11 = arith.cmpi ne, %10, %c0_i32_9 : i32
    scf.if %11 {
      %c0_10 = arith.constant 0 : index
      %c0_11 = arith.constant 0 : index
      %12 = vector.load %arg7[%c0_10, %c0_11] : memref<16x64xf32, #tpu.memory_space<vmem>>, vector<16x64xf32>
      %c0_12 = arith.constant 0 : index
      %c0_13 = arith.constant 0 : index
      %13 = vector.load %arg5[%c0_12, %c0_13] : memref<1x64xf32, #tpu.memory_space<vmem>>, vector<1x64xf32>
      %14 = vector.broadcast %13 : vector<1x64xf32> to vector<16x64xf32>
      %15 = arith.addf %12, %14 : vector<16x64xf32>
      %cst_14 = arith.constant 5.000000e-01 : f32
      %16 = vector.broadcast %cst_14 : f32 to vector<16x64xf32>
      %17 = arith.mulf %16, %15 : vector<16x64xf32>
      %cst_15 = arith.constant 4.471500e-02 : f32
      %18 = vector.broadcast %cst_15 : f32 to vector<16x64xf32>
      %19 = arith.mulf %18, %15 : vector<16x64xf32>
      %20 = arith.mulf %19, %15 : vector<16x64xf32>
      %21 = arith.mulf %20, %15 : vector<16x64xf32>
      %22 = arith.addf %15, %21 : vector<16x64xf32>
      %cst_16 = arith.constant 0.797884583 : f32
      %23 = vector.broadcast %cst_16 : f32 to vector<16x64xf32>
      %24 = arith.mulf %23, %22 : vector<16x64xf32>
      %25 = math.tanh %24 : vector<16x64xf32>
      %cst_17 = arith.constant 1.000000e+00 : f32
      %26 = vector.broadcast %cst_17 : f32 to vector<16x64xf32>
      %27 = arith.addf %26, %25 : vector<16x64xf32>
      %28 = arith.mulf %17, %27 : vector<16x64xf32>
      %29 = arith.truncf %28 : vector<16x64xf32> to vector<16x64xbf16>
      %c0_18 = arith.constant 0 : index
      %c0_19 = arith.constant 0 : index
      %30 = vector.load %arg6[%c0_18, %c0_19] : memref<16x64xbf16, #tpu.memory_space<vmem>>, vector<16x64xbf16>
      tpu.vector_store %arg6[%c0_18, %c0_19], %29 {strides = array<i32>} : memref<16x64xbf16, #tpu.memory_space<vmem>>, vector<16x64xbf16>,
    } else {
    }
    return
  }
  func.func @transform_0(%arg0: i32, %arg1: i32, %arg2: i32) -> (i32, i32) {
    %c0_i32 = arith.constant 0 : i32
    return %arg0, %arg2 : i32, i32
  }
  func.func @transform_1(%arg0: i32, %arg1: i32, %arg2: i32) -> (i32, i32) {
    %c0_i32 = arith.constant 0 : i32
    return %arg2, %arg1 : i32, i32
  }
  func.func @transform_2(%arg0: i32, %arg1: i32, %arg2: i32) -> (i32, i32) {
    %c0_i32 = arith.constant 0 : i32
    %c0_i32_0 = arith.constant 0 : i32
    return %c0_i32, %arg1 : i32, i32
  }
  func.func @transform_3(%arg0: i32, %arg1: i32, %arg2: i32) -> (i32, i32) {
    %c0_i32 = arith.constant 0 : i32
    return %arg0, %arg1 : i32, i32
  }
}

module attributes {stable_mosaic.version = 11 : i64} {
  func.func @_dense_add_ln_kernel(%arg0: i32, %arg1: i32, %arg2: memref<16x64xbf16, #tpu.memory_space<vmem>>, %arg3: memref<64x32xbf16, #tpu.memory_space<vmem>>, %arg4: memref<1x32xf32, #tpu.memory_space<vmem>>, %arg5: memref<16x32xbf16, #tpu.memory_space<vmem>>, %arg6: memref<1x32xf32, #tpu.memory_space<vmem>>, %arg7: memref<1x32xf32, #tpu.memory_space<vmem>>, %arg8: memref<16x32xbf16, #tpu.memory_space<vmem>>, %arg9: memref<16x32xf32, #tpu.memory_space<vmem>>) attributes {dimension_semantics = [#tpu.dimension_semantics<parallel>, #tpu.dimension_semantics<arbitrary>], iteration_bounds = array<i64: 1, 1>, scalar_prefetch = 0 : i64, scratch_operands = 1 : i64, tpu.core_type = #tpu.core_type<tc>, window_params = [{transform_indices = @transform_0, window_bounds = array<i64: 16, 64>}, {transform_indices = @transform_1, window_bounds = array<i64: 64, 32>}, {pipeline_mode = #tpu.pipeline_mode<synchronous>, transform_indices = @transform_2, window_bounds = array<i64: 1, 32>}, {transform_indices = @transform_3, window_bounds = array<i64: 16, 32>}, {pipeline_mode = #tpu.pipeline_mode<synchronous>, transform_indices = @transform_4, window_bounds = array<i64: 1, 32>}, {pipeline_mode = #tpu.pipeline_mode<synchronous>, transform_indices = @transform_5, window_bounds = array<i64: 1, 32>}, {transform_indices = @transform_6, window_bounds = array<i64: 16, 32>}]} {
    %c0_i32 = arith.constant 0 : i32
    %0 = arith.cmpi eq, %arg1, %c0_i32 : i32
    %1 = arith.extui %0 : i1 to i32
    %c0_i32_0 = arith.constant 0 : i32
    %2 = arith.cmpi ne, %1, %c0_i32_0 : i32
    scf.if %2 {
      %cst_10 = arith.constant 0.000000e+00 : f32
      %12 = vector.broadcast %cst_10 : f32 to vector<16x32xf32>
      %c0_11 = arith.constant 0 : index
      %c0_12 = arith.constant 0 : index
      %13 = vector.load %arg9[%c0_11, %c0_12] : memref<16x32xf32, #tpu.memory_space<vmem>>, vector<16x32xf32>
      tpu.vector_store %arg9[%c0_11, %c0_12], %12 {strides = array<i32>} : memref<16x32xf32, #tpu.memory_space<vmem>>, vector<16x32xf32>,
    } else {
    }
    %c0 = arith.constant 0 : index
    %c0_1 = arith.constant 0 : index
    %3 = vector.load %arg9[%c0, %c0_1] : memref<16x32xf32, #tpu.memory_space<vmem>>, vector<16x32xf32>
    %c0_2 = arith.constant 0 : index
    %c0_3 = arith.constant 0 : index
    %4 = vector.load %arg2[%c0_2, %c0_3] : memref<16x64xbf16, #tpu.memory_space<vmem>>, vector<16x64xbf16>
    %c0_4 = arith.constant 0 : index
    %c0_5 = arith.constant 0 : index
    %5 = vector.load %arg3[%c0_4, %c0_5] : memref<64x32xbf16, #tpu.memory_space<vmem>>, vector<64x32xbf16>
    %cst = arith.constant dense<0.000000e+00> : vector<16x32xf32>
    %6 = tpu.matmul %4, %5, %cst {dimension_numbers = #tpu.dot_dimension_numbers<[1], [0], [0], [1], [0, 0, 1, 1], [], []>} : vector<16x64xbf16>, vector<64x32xbf16>, vector<16x32xf32> -> vector<16x32xf32>
    %7 = arith.addf %3, %6 : vector<16x32xf32>
    %c0_6 = arith.constant 0 : index
    %c0_7 = arith.constant 0 : index
    %8 = vector.load %arg9[%c0_6, %c0_7] : memref<16x32xf32, #tpu.memory_space<vmem>>, vector<16x32xf32>
    tpu.vector_store %arg9[%c0_6, %c0_7], %7 {strides = array<i32>} : memref<16x32xf32, #tpu.memory_space<vmem>>, vector<16x32xf32>,
    %c0_i32_8 = arith.constant 0 : i32
    %9 = arith.cmpi eq, %arg1, %c0_i32_8 : i32
    %10 = arith.extui %9 : i1 to i32
    %c0_i32_9 = arith.constant 0 : i32
    %11 = arith.cmpi ne, %10, %c0_i32_9 : i32
    scf.if %11 {
      %c0_10 = arith.constant 0 : index
      %c0_11 = arith.constant 0 : index
      %12 = vector.load %arg9[%c0_10, %c0_11] : memref<16x32xf32, #tpu.memory_space<vmem>>, vector<16x32xf32>
      %c0_12 = arith.constant 0 : index
      %c0_13 = arith.constant 0 : index
      %13 = vector.load %arg4[%c0_12, %c0_13] : memref<1x32xf32, #tpu.memory_space<vmem>>, vector<1x32xf32>
      %14 = vector.broadcast %13 : vector<1x32xf32> to vector<16x32xf32>
      %15 = arith.addf %12, %14 : vector<16x32xf32>
      %c0_14 = arith.constant 0 : index
      %c0_15 = arith.constant 0 : index
      %16 = vector.load %arg5[%c0_14, %c0_15] : memref<16x32xbf16, #tpu.memory_space<vmem>>, vector<16x32xbf16>
      %17 = arith.extf %16 : vector<16x32xbf16> to vector<16x32xf32>
      %18 = arith.addf %15, %17 : vector<16x32xf32>
      %cst_16 = arith.constant dense<0.000000e+00> : vector<16xf32>
      %19 = vector.multi_reduction <add>, %18, %cst_16 [1] : vector<16x32xf32> to vector<16xf32>
      %20 = vector.shape_cast %19 : vector<16xf32> to vector<16x1xf32>
      %cst_17 = arith.constant 3.200000e+01 : f32
      %21 = vector.broadcast %cst_17 : f32 to vector<16x1xf32>
      %22 = arith.divf %20, %21 : vector<16x1xf32>
      %23 = vector.broadcast %22 : vector<16x1xf32> to vector<16x32xf32>
      %24 = arith.subf %18, %23 : vector<16x32xf32>
      %25 = arith.mulf %24, %24 : vector<16x32xf32>
      %cst_18 = arith.constant dense<0.000000e+00> : vector<16xf32>
      %26 = vector.multi_reduction <add>, %25, %cst_18 [1] : vector<16x32xf32> to vector<16xf32>
      %27 = vector.shape_cast %26 : vector<16xf32> to vector<16x1xf32>
      %cst_19 = arith.constant 3.200000e+01 : f32
      %28 = vector.broadcast %cst_19 : f32 to vector<16x1xf32>
      %29 = arith.divf %27, %28 : vector<16x1xf32>
      %30 = vector.broadcast %22 : vector<16x1xf32> to vector<16x32xf32>
      %31 = arith.subf %18, %30 : vector<16x32xf32>
      %cst_20 = arith.constant 9.99999996E-13 : f32
      %32 = vector.broadcast %cst_20 : f32 to vector<16x1xf32>
      %33 = arith.addf %29, %32 : vector<16x1xf32>
      %34 = math.rsqrt %33 : vector<16x1xf32>
      %35 = vector.broadcast %34 : vector<16x1xf32> to vector<16x32xf32>
      %36 = arith.mulf %31, %35 : vector<16x32xf32>
      %c0_21 = arith.constant 0 : index
      %c0_22 = arith.constant 0 : index
      %37 = vector.load %arg6[%c0_21, %c0_22] : memref<1x32xf32, #tpu.memory_space<vmem>>, vector<1x32xf32>
      %38 = vector.broadcast %37 : vector<1x32xf32> to vector<16x32xf32>
      %39 = arith.mulf %36, %38 : vector<16x32xf32>
      %c0_23 = arith.constant 0 : index
      %c0_24 = arith.constant 0 : index
      %40 = vector.load %arg7[%c0_23, %c0_24] : memref<1x32xf32, #tpu.memory_space<vmem>>, vector<1x32xf32>
      %41 = vector.broadcast %40 : vector<1x32xf32> to vector<16x32xf32>
      %42 = arith.addf %39, %41 : vector<16x32xf32>
      %43 = arith.truncf %42 : vector<16x32xf32> to vector<16x32xbf16>
      %c0_25 = arith.constant 0 : index
      %c0_26 = arith.constant 0 : index
      %44 = vector.load %arg8[%c0_25, %c0_26] : memref<16x32xbf16, #tpu.memory_space<vmem>>, vector<16x32xbf16>
      tpu.vector_store %arg8[%c0_25, %c0_26], %43 {strides = array<i32>} : memref<16x32xbf16, #tpu.memory_space<vmem>>, vector<16x32xbf16>,
    } else {
    }
    return
  }
  func.func @transform_0(%arg0: i32, %arg1: i32) -> (i32, i32) {
    %c0_i32 = arith.constant 0 : i32
    return %arg0, %arg1 : i32, i32
  }
  func.func @transform_1(%arg0: i32, %arg1: i32) -> (i32, i32) {
    %c0_i32 = arith.constant 0 : i32
    %c0_i32_0 = arith.constant 0 : i32
    return %arg1, %c0_i32 : i32, i32
  }
  func.func @transform_2(%arg0: i32, %arg1: i32) -> (i32, i32) {
    %c0_i32 = arith.constant 0 : i32
    %c0_i32_0 = arith.constant 0 : i32
    %c0_i32_1 = arith.constant 0 : i32
    return %c0_i32, %c0_i32_0 : i32, i32
  }
  func.func @transform_3(%arg0: i32, %arg1: i32) -> (i32, i32) {
    %c0_i32 = arith.constant 0 : i32
    %c0_i32_0 = arith.constant 0 : i32
    return %arg0, %c0_i32 : i32, i32
  }
  func.func @transform_4(%arg0: i32, %arg1: i32) -> (i32, i32) {
    %c0_i32 = arith.constant 0 : i32
    %c0_i32_0 = arith.constant 0 : i32
    %c0_i32_1 = arith.constant 0 : i32
    return %c0_i32, %c0_i32_0 : i32, i32
  }
  func.func @transform_5(%arg0: i32, %arg1: i32) -> (i32, i32) {
    %c0_i32 = arith.constant 0 : i32
    %c0_i32_0 = arith.constant 0 : i32
    %c0_i32_1 = arith.constant 0 : i32
    return %c0_i32, %c0_i32_0 : i32, i32
  }
  func.func @transform_6(%arg0: i32, %arg1: i32) -> (i32, i32) {
    %c0_i32 = arith.constant 0 : i32
    %c0_i32_0 = arith.constant 0 : i32
    return %arg0, %c0_i32 : i32, i32
  }
}

</mosaic_0001>

<llo_original>
// kernel: bert_keyword_extraction_forward.11
$region0: #{bert_keyword_extraction_forward.11}
  #allocation0 [shape = 'u32[]', space=smem, size = 0x4, offset = 0x4, fixed_abs, tag = 'smem constant byte address 0x4 - core index']
  #allocation1 [shape = 'u32[144,128]{1,0:T(1,128)}', space=vmem, size = 0x12000, scoped, tag = 'internal scratch']
  %s0 = inlined_call_operand.vmem [shape: f32[16,32], index: 0, kind: input, shape index: {}]
  %s1 = inlined_call_operand.vmem [shape: f32[1,32], index: 1, kind: input, shape index: {}]
  %s2 = inlined_call_operand.vmem [shape: f32[1,32], index: 2, kind: input, shape index: {}]
  %s3 = inlined_call_operand.vmem [shape: bf16[16,32], index: 3, kind: output, shape index: {}]
  %s4 = sld [smem:[#allocation0]]
  $region22: #{bert_keyword_extraction_forward.11} parent=0
    _
  %s6 = ssub.s32 1, %s4
  %s7 = scalar_select 0, %s6, %s4
  // Predicated region
  $region2: #{bert_keyword_extraction_forward.11} parent=0 // pred_check
    _
  $region3: #{bert_keyword_extraction_forward.11} parent=0 // pred_check_branch
    %9 = sbr.rel (0) target = $region5
  $region4: #{bert_keyword_extraction_forward.11} parent=0 // pred_region
    _
  $region5: #{bert_keyword_extraction_forward.11} parent=0 // pred_fallthru
    _
  // Predicated region
  $region6: #{bert_keyword_extraction_forward.11} parent=0 // pred_check
    _
  $region7: #{bert_keyword_extraction_forward.11} parent=0 // pred_check_branch
    %11 = sbr.rel (0) target = $region9
  $region8: #{bert_keyword_extraction_forward.11} parent=0 // pred_region
    _
  $region9: #{bert_keyword_extraction_forward.11} parent=0 // pred_fallthru
    _
  // Predicated region
  $region10: #{bert_keyword_extraction_forward.11} parent=0 // pred_check
    _
  $region11: #{bert_keyword_extraction_forward.11} parent=0 // pred_check_branch
    %13 = sbr.rel (0) target = $region13
  $region12: #{bert_keyword_extraction_forward.11} parent=0 // pred_region
    _
  $region13: #{bert_keyword_extraction_forward.11} parent=0 // pred_fallthru
    _
  %v14 = vld [vmem:[%s0] sm:$0xff]
  %v15 = vld [vmem:[%s0 + $0x8] sm:$0xff]
  %vm16 = vcmask 261120
  %v17 = vsel %vm16, %v14, 0.0
  %18 = vadd.xlane.f32.xlu0 %v17
  %v19 = vpop.xlane.xlu0 %18
  %v20 = vsel %vm16, %v15, 0.0
  %21 = vadd.xlane.f32.xlu0 %v20
  %v22 = vpop.xlane.xlu0 %21
  %v23 = vrcp.pop 32.0
  %v24 = vmul.f32 %v19, %v23
  %v25 = vmul.f32 %v22, %v23
  %v26 = vsub.f32 %v14, %v24
  %v27 = vsub.f32 %v15, %v25
  %v28 = vmul.f32 %v26, %v26
  %v29 = vmul.f32 %v27, %v27
  %v30 = vsel %vm16, %v28, 0.0
  %31 = vadd.xlane.f32.xlu0 %v30
  %v32 = vpop.xlane.xlu0 %31
  %v33 = vsel %vm16, %v29, 0.0
  %34 = vadd.xlane.f32.xlu0 %v33
  %v35 = vpop.xlane.xlu0 %34
  %v36 = vmul.f32 %v32, %v23
  %v37 = vmul.f32 %v35, %v23
  %v38 = vadd.f32 %v36, 1e-12
  %v39 = vadd.f32 %v37, 1e-12
  %v40 = vrsqrt.pop %v38
  %v41 = vrsqrt.pop %v39
  %v42 = vmul.f32 %v26, %v40
  %v43 = vmul.f32 %v27, %v41
  %v44 = vld [vmem:[%s1] sm:$0x1]
  %v46 = vlaneseq
  %v47 = vshrl.u32 %v46, 7
  %v48 = vsub.s32 0, %v47
  %v49 = vrot.slane %v44, %v48
  %v51 = vmul.f32 %v42, %v49
  %v52 = vmul.f32 %v43, %v49
  %v53 = vld [vmem:[%s2] sm:$0x1]
  %v55 = vlaneseq
  %v56 = vshrl.u32 %v55, 7
  %v57 = vsub.s32 0, %v56
  %v58 = vrot.slane %v53, %v57
  %v60 = vadd.f32 %v51, %v58
  %v61 = vadd.f32 %v52, %v58
  %v62 = vpack.c.bf16 %v61, %v60
  %v64 = vunpack.c.l.b16 %v62
  %v65 = vunpack.c.h.b16 %v62
  %v66 = vpack.c.b16 %v64, %v64
  %v67 = vpack.c.b16 %v65, %v65
  %vm70 = vcmask 257024
  %71 = vst.msk [vmem:[%s3] sm:$0xf] %vm70, %v66
  %72 = vst.msk [vmem:[%s3 + $0x4] sm:$0xf] %vm70, %v67
  // Predicated region
  $region14: #{bert_keyword_extraction_forward.11} parent=0 // pred_check
    _
  $region15: #{bert_keyword_extraction_forward.11} parent=0 // pred_check_branch
    %74 = sbr.rel (0) target = $region17
  $region16: #{bert_keyword_extraction_forward.11} parent=0 // pred_region
    _
  $region17: #{bert_keyword_extraction_forward.11} parent=0 // pred_fallthru
    _
  // Predicated region
  $region18: #{bert_keyword_extraction_forward.11} parent=0 // pred_check
    _
  $region19: #{bert_keyword_extraction_forward.11} parent=0 // pred_check_branch
    %76 = sbr.rel (0) target = $region21
  $region20: #{bert_keyword_extraction_forward.11} parent=0 // pred_region
    _
  $region21: #{bert_keyword_extraction_forward.11} parent=0 // pred_fallthru
    _

// kernel: bert_keyword_extraction_forward.12
$region0: #{bert_keyword_extraction_forward.12}
  #allocation0 [shape = 'u32[]', space=smem, size = 0x4, offset = 0x4, fixed_abs, tag = 'smem constant byte address 0x4 - core index']
  #allocation1 [shape = 'u32[144,128]{1,0:T(1,128)}', space=vmem, size = 0x12000, scoped, tag = 'internal scratch']
  #allocation2 [shape = 'f32[16,96]{1,0:T(8,128)}', space=vmem, size = 0x2000, scoped, tag = 'scratch operand']
  %s0 = inlined_call_operand.vmem [shape: bf16[16,32], index: 0, kind: input, shape index: {}]
  %s1 = inlined_call_operand.vmem [shape: bf16[32,96], index: 1, kind: input, shape index: {}]
  %s2 = inlined_call_operand.vmem [shape: f32[1,96], index: 2, kind: input, shape index: {}]
  %s3 = inlined_call_operand.vmem [shape: bf16[16,96], index: 3, kind: output, shape index: {}]
  %s4 = sld [smem:[#allocation0]]
  $region30: #{bert_keyword_extraction_forward.12} parent=0
    _
  %s6 = ssub.s32 1, %s4
  %s7 = scalar_select 0, %s6, %s4
  // Predicated region
  $region2: #{bert_keyword_extraction_forward.12} parent=0 // pred_check
    _
  $region3: #{bert_keyword_extraction_forward.12} parent=0 // pred_check_branch
    %9 = sbr.rel (0) target = $region5
  $region4: #{bert_keyword_extraction_forward.12} parent=0 // pred_region
    _
  $region5: #{bert_keyword_extraction_forward.12} parent=0 // pred_fallthru
    _
  // Predicated region
  $region6: #{bert_keyword_extraction_forward.12} parent=0 // pred_check
    _
  $region7: #{bert_keyword_extraction_forward.12} parent=0 // pred_check_branch
    %11 = sbr.rel (0) target = $region9
  $region8: #{bert_keyword_extraction_forward.12} parent=0 // pred_region
    _
  $region9: #{bert_keyword_extraction_forward.12} parent=0 // pred_fallthru
    _
  // Predicated region
  $region10: #{bert_keyword_extraction_forward.12} parent=0 // pred_check
    _
  $region11: #{bert_keyword_extraction_forward.12} parent=0 // pred_check_branch
    %13 = sbr.rel (0) target = $region13
  $region12: #{bert_keyword_extraction_forward.12} parent=0 // pred_region
    _
  $region13: #{bert_keyword_extraction_forward.12} parent=0 // pred_fallthru
    _
  %p15 = scmp.eq.s32.totalorder 0, 0
  // Predicated region
  $region14: #{bert_keyword_extraction_forward.12} parent=0 // pred_check
    %p16 = pneg %p15
  $region15: #{bert_keyword_extraction_forward.12} parent=0 // pred_check_branch
    %18 = sbr.rel (%p16) target = $region17
  $region16: #{bert_keyword_extraction_forward.12} parent=0 // pred_region
    %vm19 = vcmask 785408
    %20 = vst.msk [vmem:[#allocation2] sm:$0xff] %vm19, 0.0
    %21 = vst.msk [vmem:[#allocation2 + $0x8] sm:$0xff] %vm19, 0.0
  $region17: #{bert_keyword_extraction_forward.12} parent=0 // pred_fallthru
    _
  %v22 = vld [vmem:[#allocation2] sm:$0xff]
  %v23 = vld [vmem:[#allocation2 + $0x8] sm:$0xff]
  %v24 = vld [vmem:[%s0] sm:$0xf]
  %v25 = vld [vmem:[%s0 + $0x4] sm:$0xf]
  %v26 = vld [vmem:[%s1] sm:$0xf]
  %v27 = vld [vmem:[%s1 + $0x4] sm:$0xf]
  %v28 = vld [vmem:[%s1 + $0x8] sm:$0xf]
  %v29 = vld [vmem:[%s1 + $0xc] sm:$0xf]
  %v32 = vunpack.c.l.b16 %v24
  %v33 = vunpack.c.l.b16 %v25
  %v34 = vpack.c.b16 %v33, %v32
  %v39 = vunpack.c.l.b16 %v26
  %v40 = vunpack.c.l.b16 %v27
  %v41 = vunpack.c.l.b16 %v28
  %v42 = vunpack.c.l.b16 %v29
  %v43 = vpack.c.b16 %v40, %v39
  %v44 = vpack.c.b16 %v42, %v41
  %vm47 = vcmask 261120
  %v49 = vsel %vm47, %v34, 0
  %51 = vmatprep.subr.bf16.mxu0 0
  %52 = vmatpush1.bf16.msra.mxu0 %v43
  %53 = vmatprep.subr.bf16.mxu0 0
  %54 = vmatpush1.bf16.msra.mxu0 %v44
  %55 = vmatprep.subr.bf16.mxu0 0
  %56 = vmatpush1.bf16.msra.mxu0 0
  %57 = vmatprep.subr.bf16.mxu0 0
  %58 = vmatpush1.bf16.msra.mxu0 0
  %59 = vmatprep.subr.bf16.mxu0 0
  %60 = vmatpush1.bf16.msra.mxu0 0
  %61 = vmatprep.subr.bf16.mxu0 0
  %62 = vmatpush1.bf16.msra.mxu0 0
  %63 = vmatprep.subr.bf16.mxu0 0
  %64 = vmatpush1.bf16.msra.mxu0 0
  %65 = vmatprep.subr.bf16.mxu0 0
  %66 = vmatpush1.bf16.msra.mxu0 0
  %67 = vmatprep.subr.bf16.mxu0 0
  %68 = vmatpush1.bf16.msra.mxu0 0
  %69 = vmatprep.subr.bf16.mxu0 0
  %70 = vmatpush1.bf16.msra.mxu0 0
  %71 = vmatprep.subr.bf16.mxu0 0
  %72 = vmatpush1.bf16.msra.mxu0 0
  %73 = vmatprep.subr.bf16.mxu0 0
  %74 = vmatpush1.bf16.msra.mxu0 0
  %75 = vmatprep.subr.bf16.mxu0 0
  %76 = vmatpush1.bf16.msra.mxu0 0
  %77 = vmatprep.subr.bf16.mxu0 0
  %78 = vmatpush1.bf16.msra.mxu0 0
  %79 = vmatprep.subr.bf16.mxu0 0
  %80 = vmatpush1.bf16.msra.mxu0 0
  %81 = vmatprep.subr.bf16.mxu0 0
  %82 = vmatpush1.bf16.msra.mxu0 0
  %83 = vmatprep.mubr.bf16.mxu0 0
  %84 = vmatmul.mubr.bf16.gmra.mrb[0].mxu0 %v49
  %v85 = vpop.f32.mrb[0].mxu0
  %v86 = vadd.f32 0.0, %v85
  %v87 = vpop.f32.mrb[0].mxu0
  %v88 = vpop.f32.mrb[0].mxu0
  %v89 = vadd.f32 0.0, %v88
  %v90 = vpop.f32.mrb[0].mxu0
  %91 = vdwg.mxu0
  %v92 = vadd.f32 %v22, %v86
  %v93 = vadd.f32 %v23, %v89
  %vm94 = vcmask 785408
  %95 = vst.msk [vmem:[#allocation2] sm:$0xff] %vm94, %v92
  %96 = vst.msk [vmem:[#allocation2 + $0x8] sm:$0xff] %vm94, %v93
  // Predicated region
  $region18: #{bert_keyword_extraction_forward.12} parent=0 // pred_check
    %p97 = pneg %p15
  $region19: #{bert_keyword_extraction_forward.12} parent=0 // pred_check_branch
    %99 = sbr.rel (%p97) target = $region21
  $region20: #{bert_keyword_extraction_forward.12} parent=0 // pred_region
    %v100 = vld [vmem:[#allocation2] sm:$0xff]
    %v101 = vld [vmem:[#allocation2 + $0x8] sm:$0xff]
    %v102 = vld [vmem:[%s2] sm:$0x1]
    %v104 = vlaneseq
    %v105 = vshrl.u32 %v104, 7
    %v106 = vsub.s32 0, %v105
    %v107 = vrot.slane %v102, %v106
    %v109 = vadd.f32 %v100, %v107
    %v110 = vadd.f32 %v101, %v107
    %v111 = vpack.c.bf16 %v110, %v109
    %v113 = vunpack.c.l.b16 %v111
    %v114 = vunpack.c.h.b16 %v111
    %v115 = vpack.c.b16 %v113, %v113
    %v116 = vpack.c.b16 %v114, %v114
    %vm119 = vcmask 781312
    %120 = vst.msk [vmem:[%s3] sm:$0xf] %vm119, %v115
    %121 = vst.msk [vmem:[%s3 + $0x4] sm:$0xf] %vm119, %v116
  $region21: #{bert_keyword_extraction_forward.12} parent=0 // pred_fallthru
    _
  // Predicated region
  $region22: #{bert_keyword_extraction_forward.12} parent=0 // pred_check
    _
  $region23: #{bert_keyword_extraction_forward.12} parent=0 // pred_check_branch
    %123 = sbr.rel (0) target = $region25
  $region24: #{bert_keyword_extraction_forward.12} parent=0 // pred_region
    _
  $region25: #{bert_keyword_extraction_forward.12} parent=0 // pred_fallthru
    _
  // Predicated region
  $region26: #{bert_keyword_extraction_forward.12} parent=0 // pred_check
    _
  $region27: #{bert_keyword_extraction_forward.12} parent=0 // pred_check_branch
    %125 = sbr.rel (0) target = $region29
  $region28: #{bert_keyword_extraction_forward.12} parent=0 // pred_region
    _
  $region29: #{bert_keyword_extraction_forward.12} parent=0 // pred_fallthru
    _

// kernel: bert_keyword_extraction_forward.13
$region0: #{bert_keyword_extraction_forward.13}
  #allocation0 [shape = 'u32[]', space=smem, size = 0x4, offset = 0x4, fixed_abs, tag = 'smem constant byte address 0x4 - core index']
  #allocation1 [shape = 'u32[144,128]{1,0:T(1,128)}', space=vmem, size = 0x12000, scoped, tag = 'internal scratch']
  %s0 = inlined_call_operand.vmem [shape: bf16[16,96], index: 0, kind: input, shape index: {}]
  %s1 = inlined_call_operand.vmem [shape: f32[2,1,8], index: 1, kind: input, shape index: {}]
  %s2 = inlined_call_operand.vmem [shape: bf16[16,32], index: 2, kind: output, shape index: {}]
  %s3 = sld [smem:[#allocation0]]
  $region41: #{bert_keyword_extraction_forward.13} parent=0
    _
  %s5 = ssub.s32 1, %s3
  %s6 = scalar_select 0, %s5, %s3
  loop: start=0, step=1, limit=4
  $region2: #{bert_keyword_extraction_forward.13} parent=0 // loop_pre_header
    _
  $region3: #{bert_keyword_extraction_forward.13} parent=0 // loop_header
    %s8 = sphi 0, %s12
    %p9 = scmp.ge.s32.totalorder %s8, 4
    %s18 = sphi 0, %s20
    %s21 = sphi 0, %s18
    %s22 = sphi 0, %s21
    %s38 = sphi 0, %s22
    %s44 = sphi 0, %s46
    %s47 = sphi 0, %s44
    %s48 = sphi 0, %s47
    %s64 = sphi 0, %s48
    %s70 = sphi 0, %s72
    %s73 = sphi 0, %s70
    %s74 = sphi 0, %s73
    %s90 = sphi 0, %s74
  $region4: #{bert_keyword_extraction_forward.13} parent=0 // loop_header_branch
    %11 = sbr.rel (%p9) target = $region8
  $region5: #{bert_keyword_extraction_forward.13} parent=0 // loop_body
    %s13 = ssub.s32 %s8, 1
    %s14 = ssub.s32 %s8, 2
    %s15 = sadd.s32 %s8, 1
    %s16 = ssub.s32 %s8, %s15
    %p17 = scmp.eq.s32.totalorder %s16, 0
    %s19 = sadd.s32 %s18, 1
    %s20 = scalar_select %p17, %s18, %s19
    %p23 = pneg %p17
    %p24 = scmp.eq.s32.totalorder %s8, 1
    %p25 = por %p23, %p24
    %p26 = scmp.ne.s32.totalorder %s18, %s21
    %p27 = scmp.eq.s32.totalorder %s8, 0
    %p28 = por %p26, %p27
    %p29 = scmp.ne.s32.totalorder %s18, %s21
    %p30 = scmp.eq.s32.totalorder %s13, 1
    %p31 = por %p29, %p30
    %p32 = scmp.ne.s32.totalorder %s21, %s22
    %p33 = scmp.eq.s32.totalorder %s13, 0
    %p34 = por %p32, %p33
    %p35 = scmp.ne.s32.totalorder %s21, %s22
    %p36 = scmp.eq.s32.totalorder %s14, 1
    %p37 = por %p35, %p36
    %p39 = scmp.ne.s32.totalorder %s22, %s38
    %p40 = scmp.eq.s32.totalorder %s14, 0
    %p41 = por %p39, %p40
    %s42 = ssub.s32 %s8, %s15
    %p43 = scmp.eq.s32.totalorder %s42, 0
    %s45 = sadd.s32 %s44, 1
    %s46 = scalar_select %p43, %s44, %s45
    %p49 = pneg %p43
    %p50 = scmp.eq.s32.totalorder %s8, 1
    %p51 = por %p49, %p50
    %p52 = scmp.ne.s32.totalorder %s44, %s47
    %p53 = scmp.eq.s32.totalorder %s8, 0
    %p54 = por %p52, %p53
    %p55 = scmp.ne.s32.totalorder %s44, %s47
    %p56 = scmp.eq.s32.totalorder %s13, 1
    %p57 = por %p55, %p56
    %p58 = scmp.ne.s32.totalorder %s47, %s48
    %p59 = scmp.eq.s32.totalorder %s13, 0
    %p60 = por %p58, %p59
    %p61 = scmp.ne.s32.totalorder %s47, %s48
    %p62 = scmp.eq.s32.totalorder %s14, 1
    %p63 = por %p61, %p62
    %p65 = scmp.ne.s32.totalorder %s48, %s64
    %p66 = scmp.eq.s32.totalorder %s14, 0
    %p67 = por %p65, %p66
    %s68 = ssub.s32 %s8, %s15
    %p69 = scmp.eq.s32.totalorder %s68, 0
    %s71 = sadd.s32 %s70, 1
    %s72 = scalar_select %p69, %s70, %s71
    %p75 = pneg %p69
    %p76 = scmp.eq.s32.totalorder %s8, 1
    %p77 = por %p75, %p76
    %p78 = scmp.ne.s32.totalorder %s70, %s73
    %p79 = scmp.eq.s32.totalorder %s8, 0
    %p80 = por %p78, %p79
    %p81 = scmp.ne.s32.totalorder %s70, %s73
    %p82 = scmp.eq.s32.totalorder %s13, 1
    %p83 = por %p81, %p82
    %p84 = scmp.ne.s32.totalorder %s73, %s74
    %p85 = scmp.eq.s32.totalorder %s13, 0
    %p86 = por %p84, %p85
    %p87 = scmp.ne.s32.totalorder %s73, %s74
    %p88 = scmp.eq.s32.totalorder %s14, 1
    %p89 = por %p87, %p88
    %p91 = scmp.ne.s32.totalorder %s74, %s90
    %p92 = scmp.eq.s32.totalorder %s14, 0
    %p93 = por %p91, %p92
    %p94 = scmp.le.s32.totalorder 1, %s8
    %p95 = scmp.lt.s32.totalorder %s8, 3
    %p96 = pnand %p94, %p95
    %p97 = pneg %p96
    // Predicated region
    $region9: #{bert_keyword_extraction_forward.13} parent=5 // pred_check
      _
    $region10: #{bert_keyword_extraction_forward.13} parent=5 // pred_check_branch
      %99 = sbr.rel (%p96) target = $region12
    $region11: #{bert_keyword_extraction_forward.13} parent=5 // pred_region
      %s100 = ssub.s32 %s8, 1
    $region12: #{bert_keyword_extraction_forward.13} parent=5 // pred_fallthru
      _
    %p101 = scmp.lt.s32.totalorder %s8, 2
    // Predicated region
    $region13: #{bert_keyword_extraction_forward.13} parent=5 // pred_check
      %p102 = pneg %p101
    $region14: #{bert_keyword_extraction_forward.13} parent=5 // pred_check_branch
      %104 = sbr.rel (%p102) target = $region16
    $region15: #{bert_keyword_extraction_forward.13} parent=5 // pred_region
      // Predicated region
      $region17: #{bert_keyword_extraction_forward.13} parent=15 // pred_check
        %p105 = pneg %p28
      $region18: #{bert_keyword_extraction_forward.13} parent=15 // pred_check_branch
        %107 = sbr.rel (%p105) target = $region20
      $region19: #{bert_keyword_extraction_forward.13} parent=15 // pred_region
        %p108 = scmp.lt.s32.totalorder %s8, 1
        %s109 = scalar_select %p108, %s8, 1
        %s110 = smul.addr %s109, 4
        %s111 = scalar_lea.vmem %s0, %s110
      $region20: #{bert_keyword_extraction_forward.13} parent=15 // pred_fallthru
        _
      // Predicated region
      $region21: #{bert_keyword_extraction_forward.13} parent=15 // pred_check
        %p112 = pneg %p54
      $region22: #{bert_keyword_extraction_forward.13} parent=15 // pred_check_branch
        %114 = sbr.rel (%p112) target = $region24
      $region23: #{bert_keyword_extraction_forward.13} parent=15 // pred_region
        %p115 = scmp.lt.s32.totalorder %s8, 1
        %s116 = scalar_select %p115, %s8, 1
        %s117 = scalar_lea.vmem %s1, %s116
      $region24: #{bert_keyword_extraction_forward.13} parent=15 // pred_fallthru
        _
    $region16: #{bert_keyword_extraction_forward.13} parent=5 // pred_fallthru
      _
    %p118 = scmp.le.s32.totalorder 1, %s8
    %p119 = scmp.lt.s32.totalorder %s8, 3
    %p120 = pnand %p118, %p119
    %p121 = pneg %p120
    // Predicated region
    $region25: #{bert_keyword_extraction_forward.13} parent=5 // pred_check
      _
    $region26: #{bert_keyword_extraction_forward.13} parent=5 // pred_check_branch
      %123 = sbr.rel (%p120) target = $region28
    $region27: #{bert_keyword_extraction_forward.13} parent=5 // pred_region
      %s124 = ssub.s32 %s8, 1
      %p125 = scmp.lt.s32.totalorder %s13, 1
      %s126 = scalar_select %p125, %s13, 1
      %s127 = smul.addr %s126, 4
      %s128 = scalar_lea.vmem %s0, %s127
      %p129 = pneg %p34
      %p130 = pneg %p31
      %p131 = scmp.lt.s32.totalorder %s13, 1
      %s132 = scalar_select %p131, %s13, 1
      %s133 = scalar_lea.vmem %s1, %s132
      %p134 = pneg %p60
      %p135 = pneg %p57
      %p136 = pneg %p86
      %p137 = pneg %p83
      %p138 = scmp.lt.s32.totalorder %s13, 1
      %s139 = scalar_select %p138, %s13, 1
      %s140 = smul.addr %s139, 4
      %s141 = scalar_lea.vmem %s2, %s140
      %p142 = scmp.lt.s32.totalorder %s13, 1
      %s143 = scalar_select %p142, %s13, 1
      %s144 = smul.addr %s143, 4
      %s145 = scalar_lea.vmem %s0, %s144
      %p146 = scmp.lt.s32.totalorder %s13, 1
      %s147 = scalar_select %p146, %s13, 1
      %s148 = scalar_lea.vmem %s1, %s147
      %p149 = scmp.lt.s32.totalorder %s13, 1
      %s150 = scalar_select %p149, %s13, 1
      %s151 = smul.addr %s150, 4
      %s152 = scalar_lea.vmem %s2, %s151
      %v154 = vld [vmem:[%s145] sm:$0xf]
      %v155 = vld [vmem:[%s148] sm:$0x1]
      %v157 = vunpack.c.l.b16 %v154
      %v158 = vpack.c.b16 %v157, %v157
      %159 = vrot.lane.b32.xlu0 %v158, 96
      %v160 = vpop.permute.xlu0 %159
      %vm161 = vcmask 130048
      %v163 = vsel %vm161, %v154, 0
      %v166 = vsel %vm161, %v160, 0
      %168 = vmatprep.subr.bf16.mxu0 0
      %169 = vmatpush1.bf16.xpose.msra.mxu0 %v166
      %170 = vmatprep.subr.bf16.mxu0 0
      %171 = vmatpush1.bf16.xpose.msra.mxu0 0
      %172 = vmatprep.subr.bf16.mxu0 0
      %173 = vmatpush1.bf16.xpose.msra.mxu0 0
      %174 = vmatprep.subr.bf16.mxu0 0
      %175 = vmatpush1.bf16.xpose.msra.mxu0 0
      %176 = vmatprep.subr.bf16.mxu0 0
      %177 = vmatpush1.bf16.xpose.msra.mxu0 0
      %178 = vmatprep.subr.bf16.mxu0 0
      %179 = vmatpush1.bf16.xpose.msra.mxu0 0
      %180 = vmatprep.subr.bf16.mxu0 0
      %181 = vmatpush1.bf16.xpose.msra.mxu0 0
      %182 = vmatprep.subr.bf16.mxu0 0
      %183 = vmatpush1.bf16.xpose.msra.mxu0 0
      %184 = vmatprep.subr.bf16.mxu0 0
      %185 = vmatpush1.bf16.xpose.msra.mxu0 0
      %186 = vmatprep.subr.bf16.mxu0 0
      %187 = vmatpush1.bf16.xpose.msra.mxu0 0
      %188 = vmatprep.subr.bf16.mxu0 0
      %189 = vmatpush1.bf16.xpose.msra.mxu0 0
      %190 = vmatprep.subr.bf16.mxu0 0
      %191 = vmatpush1.bf16.xpose.msra.mxu0 0
      %192 = vmatprep.subr.bf16.mxu0 0
      %193 = vmatpush1.bf16.xpose.msra.mxu0 0
      %194 = vmatprep.subr.bf16.mxu0 0
      %195 = vmatpush1.bf16.xpose.msra.mxu0 0
      %196 = vmatprep.subr.bf16.mxu0 0
      %197 = vmatpush1.bf16.xpose.msra.mxu0 0
      %198 = vmatprep.subr.bf16.mxu0 0
      %199 = vmatpush1.bf16.xpose.msra.mxu0 0
      %200 = vmatprep.mubr.bf16.mxu0 0
      %201 = vmatmul.mubr.bf16.gmra.mrb[0].mxu0 %v163
      %v202 = vpop.f32.mrb[0].mxu0
      %v203 = vadd.f32 0.0, %v202
      %v204 = vpop.f32.mrb[0].mxu0
      %v205 = vpop.f32.mrb[0].mxu0
      %v206 = vpop.f32.mrb[0].mxu0
      %207 = vdwg.mxu0
      %v208 = vmul.f32 %v203, 0.25
      %v210 = vlaneseq
      %v211 = vshrl.u32 %v210, 7
      %v212 = vsub.s32 0, %v211
      %v213 = vrot.slane %v155, %v212
      %v215 = vadd.f32 %v208, %v213
      %vm216 = vcmask 64512
      %v217 = vsel %vm216, %v215, -inf
      %218 = vmax.xlane.f32.xlu0 %v217
      %v219 = vpop.xlane.xlu0 %218
      %v220 = vsub.f32 %v215, %v219
      %v221 = vmul.f32 %v220, 1.442695
      %v222 = vpow.pop %v221
      %v223 = vsel %vm216, %v222, 0.0
      %224 = vadd.xlane.f32.xlu0 %v223
      %v225 = vpop.xlane.xlu0 %224
      %v226 = vrcp.pop %v225
      %v227 = vmul.f32 %v222, %v226
      %v228 = vpack.c.bf16 %v227, %v227
      %229 = vrot.lane.b32.xlu0 %v158, 64
      %v230 = vpop.permute.xlu0 %229
      %v232 = vsel %vm216, %v228, 0
      %vm234 = vcmask 1043456
      %v236 = vsel %vm234, %v230, 0
      %238 = vmatprep.subr.bf16.mxu0 0
      %239 = vmatpush1.bf16.msra.mxu0 %v236
      %240 = vmatprep.subr.bf16.mxu0 0
      %241 = vmatpush1.bf16.msra.mxu0 0
      %242 = vmatprep.subr.bf16.mxu0 0
      %243 = vmatpush1.bf16.msra.mxu0 0
      %244 = vmatprep.subr.bf16.mxu0 0
      %245 = vmatpush1.bf16.msra.mxu0 0
      %246 = vmatprep.subr.bf16.mxu0 0
      %247 = vmatpush1.bf16.msra.mxu0 0
      %248 = vmatprep.subr.bf16.mxu0 0
      %249 = vmatpush1.bf16.msra.mxu0 0
      %250 = vmatprep.subr.bf16.mxu0 0
      %251 = vmatpush1.bf16.msra.mxu0 0
      %252 = vmatprep.subr.bf16.mxu0 0
      %253 = vmatpush1.bf16.msra.mxu0 0
      %254 = vmatprep.subr.bf16.mxu0 0
      %255 = vmatpush1.bf16.msra.mxu0 0
      %256 = vmatprep.subr.bf16.mxu0 0
      %257 = vmatpush1.bf16.msra.mxu0 0
      %258 = vmatprep.subr.bf16.mxu0 0
      %259 = vmatpush1.bf16.msra.mxu0 0
      %260 = vmatprep.subr.bf16.mxu0 0
      %261 = vmatpush1.bf16.msra.mxu0 0
      %262 = vmatprep.subr.bf16.mxu0 0
      %263 = vmatpush1.bf16.msra.mxu0 0
      %264 = vmatprep.subr.bf16.mxu0 0
      %265 = vmatpush1.bf16.msra.mxu0 0
      %266 = vmatprep.subr.bf16.mxu0 0
      %267 = vmatpush1.bf16.msra.mxu0 0
      %268 = vmatprep.subr.bf16.mxu0 0
      %269 = vmatpush1.bf16.msra.mxu0 0
      %270 = vmatprep.mubr.bf16.mxu0 0
      %271 = vmatmul.mubr.bf16.gmra.mrb[0].mxu0 %v232
      %v272 = vpop.f32.mrb[0].mxu0
      %v273 = vadd.f32 0.0, %v272
      %v274 = vpop.f32.mrb[0].mxu0
      %v275 = vpop.f32.mrb[0].mxu0
      %v276 = vpop.f32.mrb[0].mxu0
      %277 = vdwg.mxu0
      %v278 = vpack.c.bf16 %v273, %v273
      %vm279 = vcmask 125952
      %280 = vst.msk [vmem:[%s152] sm:$0xf] %vm279, %v278
      %281 = vrot.lane.b32.xlu0 %v158, 112
      %v282 = vpop.permute.xlu0 %281
      %283 = vrot.lane.b32.xlu0 %v158, 80
      %v284 = vpop.permute.xlu0 %283
      %v286 = vsel %vm161, %v282, 0
      %v289 = vsel %vm161, %v284, 0
      %291 = vmatprep.subr.bf16.mxu0 0
      %292 = vmatpush1.bf16.xpose.msra.mxu0 %v289
      %293 = vmatprep.subr.bf16.mxu0 0
      %294 = vmatpush1.bf16.xpose.msra.mxu0 0
      %295 = vmatprep.subr.bf16.mxu0 0
      %296 = vmatpush1.bf16.xpose.msra.mxu0 0
      %297 = vmatprep.subr.bf16.mxu0 0
      %298 = vmatpush1.bf16.xpose.msra.mxu0 0
      %299 = vmatprep.subr.bf16.mxu0 0
      %300 = vmatpush1.bf16.xpose.msra.mxu0 0
      %301 = vmatprep.subr.bf16.mxu0 0
      %302 = vmatpush1.bf16.xpose.msra.mxu0 0
      %303 = vmatprep.subr.bf16.mxu0 0
      %304 = vmatpush1.bf16.xpose.msra.mxu0 0
      %305 = vmatprep.subr.bf16.mxu0 0
      %306 = vmatpush1.bf16.xpose.msra.mxu0 0
      %307 = vmatprep.subr.bf16.mxu0 0
      %308 = vmatpush1.bf16.xpose.msra.mxu0 0
      %309 = vmatprep.subr.bf16.mxu0 0
      %310 = vmatpush1.bf16.xpose.msra.mxu0 0
      %311 = vmatprep.subr.bf16.mxu0 0
      %312 = vmatpush1.bf16.xpose.msra.mxu0 0
      %313 = vmatprep.subr.bf16.mxu0 0
      %314 = vmatpush1.bf16.xpose.msra.mxu0 0
      %315 = vmatprep.subr.bf16.mxu0 0
      %316 = vmatpush1.bf16.xpose.msra.mxu0 0
      %317 = vmatprep.subr.bf16.mxu0 0
      %318 = vmatpush1.bf16.xpose.msra.mxu0 0
      %319 = vmatprep.subr.bf16.mxu0 0
      %320 = vmatpush1.bf16.xpose.msra.mxu0 0
      %321 = vmatprep.subr.bf16.mxu0 0
      %322 = vmatpush1.bf16.xpose.msra.mxu0 0
      %323 = vmatprep.mubr.bf16.mxu0 0
      %324 = vmatmul.mubr.bf16.gmra.mrb[0].mxu0 %v286
      %v325 = vpop.f32.mrb[0].mxu0
      %v326 = vadd.f32 0.0, %v325
      %v327 = vpop.f32.mrb[0].mxu0
      %v328 = vpop.f32.mrb[0].mxu0
      %v329 = vpop.f32.mrb[0].mxu0
      %330 = vdwg.mxu0
      %v331 = vmul.f32 %v326, 0.25
      %v332 = vadd.f32 %v331, %v213
      %v333 = vsel %vm216, %v332, -inf
      %334 = vmax.xlane.f32.xlu0 %v333
      %v335 = vpop.xlane.xlu0 %334
      %v336 = vsub.f32 %v332, %v335
      %v337 = vmul.f32 %v336, 1.442695
      %v338 = vpow.pop %v337
      %v339 = vsel %vm216, %v338, 0.0
      %340 = vadd.xlane.f32.xlu0 %v339
      %v341 = vpop.xlane.xlu0 %340
      %v342 = vrcp.pop %v341
      %v343 = vmul.f32 %v338, %v342
      %v344 = vpack.c.bf16 %v343, %v343
      %345 = vrot.lane.b32.xlu0 %v158, 48
      %v346 = vpop.permute.xlu0 %345
      %v348 = vsel %vm216, %v344, 0
      %v351 = vsel %vm234, %v346, 0
      %353 = vmatprep.subr.bf16.mxu0 0
      %354 = vmatpush1.bf16.msra.mxu0 %v351
      %355 = vmatprep.subr.bf16.mxu0 0
      %356 = vmatpush1.bf16.msra.mxu0 0
      %357 = vmatprep.subr.bf16.mxu0 0
      %358 = vmatpush1.bf16.msra.mxu0 0
      %359 = vmatprep.subr.bf16.mxu0 0
      %360 = vmatpush1.bf16.msra.mxu0 0
      %361 = vmatprep.subr.bf16.mxu0 0
      %362 = vmatpush1.bf16.msra.mxu0 0
      %363 = vmatprep.subr.bf16.mxu0 0
      %364 = vmatpush1.bf16.msra.mxu0 0
      %365 = vmatprep.subr.bf16.mxu0 0
      %366 = vmatpush1.bf16.msra.mxu0 0
      %367 = vmatprep.subr.bf16.mxu0 0
      %368 = vmatpush1.bf16.msra.mxu0 0
      %369 = vmatprep.subr.bf16.mxu0 0
      %370 = vmatpush1.bf16.msra.mxu0 0
      %371 = vmatprep.subr.bf16.mxu0 0
      %372 = vmatpush1.bf16.msra.mxu0 0
      %373 = vmatprep.subr.bf16.mxu0 0
      %374 = vmatpush1.bf16.msra.mxu0 0
      %375 = vmatprep.subr.bf16.mxu0 0
      %376 = vmatpush1.bf16.msra.mxu0 0
      %377 = vmatprep.subr.bf16.mxu0 0
      %378 = vmatpush1.bf16.msra.mxu0 0
      %379 = vmatprep.subr.bf16.mxu0 0
      %380 = vmatpush1.bf16.msra.mxu0 0
      %381 = vmatprep.subr.bf16.mxu0 0
      %382 = vmatpush1.bf16.msra.mxu0 0
      %383 = vmatprep.subr.bf16.mxu0 0
      %384 = vmatpush1.bf16.msra.mxu0 0
      %385 = vmatprep.mubr.bf16.mxu0 0
      %386 = vmatmul.mubr.bf16.gmra.mrb[0].mxu0 %v348
      %v387 = vpop.f32.mrb[0].mxu0
      %v388 = vadd.f32 0.0, %v387
      %v389 = vpop.f32.mrb[0].mxu0
      %v390 = vpop.f32.mrb[0].mxu0
      %v391 = vpop.f32.mrb[0].mxu0
      %392 = vdwg.mxu0
      %v393 = vpack.c.bf16 %v388, %v388
      %v395 = vunpack.c.l.b16 %v393
      %v396 = vpack.c.b16 %v395, %v395
      %397 = vrot.lane.b32.xlu0 %v396, 16
      %v398 = vpop.permute.xlu0 %397
      %vm400 = vcmask 257152
      %401 = vst.msk [vmem:[%s152] sm:$0xf] %vm400, %v398
      %p402 = scmp.lt.s32.totalorder %s13, 1
      %s403 = scalar_select %p402, %s13, 1
      %s404 = smul.addr %s403, 4
      %s405 = scalar_lea.vmem %s2, %s404
      // Predicated region
      $region29: #{bert_keyword_extraction_forward.13} parent=27 // pred_check
        %p406 = pneg %p83
      $region30: #{bert_keyword_extraction_forward.13} parent=27 // pred_check_branch
        %408 = sbr.rel (%p406) target = $region32
      $region31: #{bert_keyword_extraction_forward.13} parent=27 // pred_region
        _
      $region32: #{bert_keyword_extraction_forward.13} parent=27 // pred_fallthru
        _
    $region28: #{bert_keyword_extraction_forward.13} parent=5 // pred_fallthru
      _
    %p409 = scmp.le.s32.totalorder 2, %s8
    // Predicated region
    $region33: #{bert_keyword_extraction_forward.13} parent=5 // pred_check
      %p410 = pneg %p409
    $region34: #{bert_keyword_extraction_forward.13} parent=5 // pred_check_branch
      %412 = sbr.rel (%p410) target = $region36
    $region35: #{bert_keyword_extraction_forward.13} parent=5 // pred_region
      %s413 = ssub.s32 %s8, 2
      // Predicated region
      $region37: #{bert_keyword_extraction_forward.13} parent=35 // pred_check
        %p414 = pneg %p89
      $region38: #{bert_keyword_extraction_forward.13} parent=35 // pred_check_branch
        %416 = sbr.rel (%p414) target = $region40
      $region39: #{bert_keyword_extraction_forward.13} parent=35 // pred_region
        %p417 = scmp.lt.s32.totalorder %s14, 1
        %s418 = scalar_select %p417, %s14, 1
        %s419 = smul.addr %s418, 4
        %s420 = scalar_lea.vmem %s2, %s419
      $region40: #{bert_keyword_extraction_forward.13} parent=35 // pred_fallthru
        _
    $region36: #{bert_keyword_extraction_forward.13} parent=5 // pred_fallthru
      _
  $region6: #{bert_keyword_extraction_forward.13} parent=0 // loop_footer
    %s12 = sadd.s32 1, %s8
  $region7: #{bert_keyword_extraction_forward.13} parent=0 // loop_footer_branch
    %7 = sbr.rel target = $region3
  $region8: #{bert_keyword_extraction_forward.13} parent=0 // loop_exit
    _

// kernel: bert_keyword_extraction_forward.14
$region0: #{bert_keyword_extraction_forward.14}
  #allocation0 [shape = 'u32[]', space=smem, size = 0x4, offset = 0x4, fixed_abs, tag = 'smem constant byte address 0x4 - core index']
  #allocation1 [shape = 'u32[144,128]{1,0:T(1,128)}', space=vmem, size = 0x12000, scoped, tag = 'internal scratch']
  #allocation2 [shape = 'f32[16,32]{1,0:T(8,128)}', space=vmem, size = 0x2000, scoped, tag = 'scratch operand']
  %s0 = inlined_call_operand.vmem [shape: bf16[16,32], index: 0, kind: input, shape index: {}]
  %s1 = inlined_call_operand.vmem [shape: bf16[32,32], index: 1, kind: input, shape index: {}]
  %s2 = inlined_call_operand.vmem [shape: f32[1,32], index: 2, kind: input, shape index: {}]
  %s3 = inlined_call_operand.vmem [shape: bf16[16,32], index: 3, kind: input, shape index: {}]
  %s4 = inlined_call_operand.vmem [shape: f32[1,32], index: 4, kind: input, shape index: {}]
  %s5 = inlined_call_operand.vmem [shape: f32[1,32], index: 5, kind: input, shape index: {}]
  %s6 = inlined_call_operand.vmem [shape: bf16[16,32], index: 6, kind: output, shape index: {}]
  %s7 = sld [smem:[#allocation0]]
  $region42: #{bert_keyword_extraction_forward.14} parent=0
    _
  %s9 = ssub.s32 1, %s7
  %s10 = scalar_select 0, %s9, %s7
  // Predicated region
  $region2: #{bert_keyword_extraction_forward.14} parent=0 // pred_check
    _
  $region3: #{bert_keyword_extraction_forward.14} parent=0 // pred_check_branch
    %12 = sbr.rel (0) target = $region5
  $region4: #{bert_keyword_extraction_forward.14} parent=0 // pred_region
    _
  $region5: #{bert_keyword_extraction_forward.14} parent=0 // pred_fallthru
    _
  // Predicated region
  $region6: #{bert_keyword_extraction_forward.14} parent=0 // pred_check
    _
  $region7: #{bert_keyword_extraction_forward.14} parent=0 // pred_check_branch
    %14 = sbr.rel (0) target = $region9
  $region8: #{bert_keyword_extraction_forward.14} parent=0 // pred_region
    _
  $region9: #{bert_keyword_extraction_forward.14} parent=0 // pred_fallthru
    _
  // Predicated region
  $region10: #{bert_keyword_extraction_forward.14} parent=0 // pred_check
    _
  $region11: #{bert_keyword_extraction_forward.14} parent=0 // pred_check_branch
    %16 = sbr.rel (0) target = $region13
  $region12: #{bert_keyword_extraction_forward.14} parent=0 // pred_region
    _
  $region13: #{bert_keyword_extraction_forward.14} parent=0 // pred_fallthru
    _
  // Predicated region
  $region14: #{bert_keyword_extraction_forward.14} parent=0 // pred_check
    _
  $region15: #{bert_keyword_extraction_forward.14} parent=0 // pred_check_branch
    %18 = sbr.rel (0) target = $region17
  $region16: #{bert_keyword_extraction_forward.14} parent=0 // pred_region
    _
  $region17: #{bert_keyword_extraction_forward.14} parent=0 // pred_fallthru
    _
  // Predicated region
  $region18: #{bert_keyword_extraction_forward.14} parent=0 // pred_check
    _
  $region19: #{bert_keyword_extraction_forward.14} parent=0 // pred_check_branch
    %20 = sbr.rel (0) target = $region21
  $region20: #{bert_keyword_extraction_forward.14} parent=0 // pred_region
    _
  $region21: #{bert_keyword_extraction_forward.14} parent=0 // pred_fallthru
    _
  // Predicated region
  $region22: #{bert_keyword_extraction_forward.14} parent=0 // pred_check
    _
  $region23: #{bert_keyword_extraction_forward.14} parent=0 // pred_check_branch
    %22 = sbr.rel (0) target = $region25
  $region24: #{bert_keyword_extraction_forward.14} parent=0 // pred_region
    _
  $region25: #{bert_keyword_extraction_forward.14} parent=0 // pred_fallthru
    _
  %p24 = scmp.eq.s32.totalorder 0, 0
  // Predicated region
  $region26: #{bert_keyword_extraction_forward.14} parent=0 // pred_check
    %p25 = pneg %p24
  $region27: #{bert_keyword_extraction_forward.14} parent=0 // pred_check_branch
    %27 = sbr.rel (%p25) target = $region29
  $region28: #{bert_keyword_extraction_forward.14} parent=0 // pred_region
    %vm28 = vcmask 261120
    %29 = vst.msk [vmem:[#allocation2] sm:$0xff] %vm28, 0.0
    %30 = vst.msk [vmem:[#allocation2 + $0x8] sm:$0xff] %vm28, 0.0
  $region29: #{bert_keyword_extraction_forward.14} parent=0 // pred_fallthru
    _
  %v31 = vld [vmem:[#allocation2] sm:$0xff]
  %v32 = vld [vmem:[#allocation2 + $0x8] sm:$0xff]
  %v33 = vld [vmem:[%s0] sm:$0xf]
  %v34 = vld [vmem:[%s0 + $0x4] sm:$0xf]
  %v35 = vld [vmem:[%s1] sm:$0xf]
  %v36 = vld [vmem:[%s1 + $0x4] sm:$0xf]
  %v37 = vld [vmem:[%s1 + $0x8] sm:$0xf]
  %v38 = vld [vmem:[%s1 + $0xc] sm:$0xf]
  %v41 = vunpack.c.l.b16 %v33
  %v42 = vunpack.c.l.b16 %v34
  %v43 = vpack.c.b16 %v42, %v41
  %v48 = vunpack.c.l.b16 %v35
  %v49 = vunpack.c.l.b16 %v36
  %v50 = vunpack.c.l.b16 %v37
  %v51 = vunpack.c.l.b16 %v38
  %v52 = vpack.c.b16 %v49, %v48
  %v53 = vpack.c.b16 %v51, %v50
  %vm56 = vcmask 261120
  %v58 = vsel %vm56, %v43, 0
  %60 = vmatprep.subr.bf16.mxu0 0
  %61 = vmatpush1.bf16.msra.mxu0 %v52
  %62 = vmatprep.subr.bf16.mxu0 0
  %63 = vmatpush1.bf16.msra.mxu0 %v53
  %64 = vmatprep.subr.bf16.mxu0 0
  %65 = vmatpush1.bf16.msra.mxu0 0
  %66 = vmatprep.subr.bf16.mxu0 0
  %67 = vmatpush1.bf16.msra.mxu0 0
  %68 = vmatprep.subr.bf16.mxu0 0
  %69 = vmatpush1.bf16.msra.mxu0 0
  %70 = vmatprep.subr.bf16.mxu0 0
  %71 = vmatpush1.bf16.msra.mxu0 0
  %72 = vmatprep.subr.bf16.mxu0 0
  %73 = vmatpush1.bf16.msra.mxu0 0
  %74 = vmatprep.subr.bf16.mxu0 0
  %75 = vmatpush1.bf16.msra.mxu0 0
  %76 = vmatprep.subr.bf16.mxu0 0
  %77 = vmatpush1.bf16.msra.mxu0 0
  %78 = vmatprep.subr.bf16.mxu0 0
  %79 = vmatpush1.bf16.msra.mxu0 0
  %80 = vmatprep.subr.bf16.mxu0 0
  %81 = vmatpush1.bf16.msra.mxu0 0
  %82 = vmatprep.subr.bf16.mxu0 0
  %83 = vmatpush1.bf16.msra.mxu0 0
  %84 = vmatprep.subr.bf16.mxu0 0
  %85 = vmatpush1.bf16.msra.mxu0 0
  %86 = vmatprep.subr.bf16.mxu0 0
  %87 = vmatpush1.bf16.msra.mxu0 0
  %88 = vmatprep.subr.bf16.mxu0 0
  %89 = vmatpush1.bf16.msra.mxu0 0
  %90 = vmatprep.subr.bf16.mxu0 0
  %91 = vmatpush1.bf16.msra.mxu0 0
  %92 = vmatprep.mubr.bf16.mxu0 0
  %93 = vmatmul.mubr.bf16.gmra.mrb[0].mxu0 %v58
  %v94 = vpop.f32.mrb[0].mxu0
  %v95 = vadd.f32 0.0, %v94
  %v96 = vpop.f32.mrb[0].mxu0
  %v97 = vpop.f32.mrb[0].mxu0
  %v98 = vadd.f32 0.0, %v97
  %v99 = vpop.f32.mrb[0].mxu0
  %100 = vdwg.mxu0
  %v101 = vadd.f32 %v31, %v95
  %v102 = vadd.f32 %v32, %v98
  %103 = vst.msk [vmem:[#allocation2] sm:$0xff] %vm56, %v101
  %104 = vst.msk [vmem:[#allocation2 + $0x8] sm:$0xff] %vm56, %v102
  // Predicated region
  $region30: #{bert_keyword_extraction_forward.14} parent=0 // pred_check
    %p105 = pneg %p24
  $region31: #{bert_keyword_extraction_forward.14} parent=0 // pred_check_branch
    %107 = sbr.rel (%p105) target = $region33
  $region32: #{bert_keyword_extraction_forward.14} parent=0 // pred_region
    %v108 = vld [vmem:[#allocation2] sm:$0xff]
    %v109 = vld [vmem:[#allocation2 + $0x8] sm:$0xff]
    %v110 = vld [vmem:[%s2] sm:$0x1]
    %v112 = vlaneseq
    %v113 = vshrl.u32 %v112, 7
    %v114 = vsub.s32 0, %v113
    %v115 = vrot.slane %v110, %v114
    %v117 = vadd.f32 %v108, %v115
    %v118 = vadd.f32 %v109, %v115
    %v119 = vld [vmem:[%s3] sm:$0xf]
    %v120 = vld [vmem:[%s3 + $0x4] sm:$0xf]
    %v121 = vunpack.c.l.bf16 %v119
    %v122 = vunpack.c.l.bf16 %v120
    %v123 = vadd.f32 %v117, %v121
    %v124 = vadd.f32 %v118, %v122
    %v125 = vsel %vm56, %v123, 0.0
    %126 = vadd.xlane.f32.xlu0 %v125
    %v127 = vpop.xlane.xlu0 %126
    %v128 = vsel %vm56, %v124, 0.0
    %129 = vadd.xlane.f32.xlu0 %v128
    %v130 = vpop.xlane.xlu0 %129
    %v131 = vrcp.pop 32.0
    %v132 = vmul.f32 %v127, %v131
    %v133 = vmul.f32 %v130, %v131
    %v134 = vsub.f32 %v123, %v132
    %v135 = vsub.f32 %v124, %v133
    %v136 = vmul.f32 %v134, %v134
    %v137 = vmul.f32 %v135, %v135
    %v138 = vsel %vm56, %v136, 0.0
    %139 = vadd.xlane.f32.xlu0 %v138
    %v140 = vpop.xlane.xlu0 %139
    %v141 = vsel %vm56, %v137, 0.0
    %142 = vadd.xlane.f32.xlu0 %v141
    %v143 = vpop.xlane.xlu0 %142
    %v144 = vmul.f32 %v140, %v131
    %v145 = vmul.f32 %v143, %v131
    %v146 = vadd.f32 %v144, 1e-12
    %v147 = vadd.f32 %v145, 1e-12
    %v148 = vrsqrt.pop %v146
    %v149 = vrsqrt.pop %v147
    %v150 = vmul.f32 %v134, %v148
    %v151 = vmul.f32 %v135, %v149
    %v152 = vld [vmem:[%s4] sm:$0x1]
    %v154 = vlaneseq
    %v155 = vshrl.u32 %v154, 7
    %v156 = vsub.s32 0, %v155
    %v157 = vrot.slane %v152, %v156
    %v159 = vmul.f32 %v150, %v157
    %v160 = vmul.f32 %v151, %v157
    %v161 = vld [vmem:[%s5] sm:$0x1]
    %v163 = vlaneseq
    %v164 = vshrl.u32 %v163, 7
    %v165 = vsub.s32 0, %v164
    %v166 = vrot.slane %v161, %v165
    %v168 = vadd.f32 %v159, %v166
    %v169 = vadd.f32 %v160, %v166
    %v170 = vpack.c.bf16 %v169, %v168
    %v172 = vunpack.c.l.b16 %v170
    %v173 = vunpack.c.h.b16 %v170
    %v174 = vpack.c.b16 %v172, %v172
    %v175 = vpack.c.b16 %v173, %v173
    %vm178 = vcmask 257024
    %179 = vst.msk [vmem:[%s6] sm:$0xf] %vm178, %v174
    %180 = vst.msk [vmem:[%s6 + $0x4] sm:$0xf] %vm178, %v175
  $region33: #{bert_keyword_extraction_forward.14} parent=0 // pred_fallthru
    _
  // Predicated region
  $region34: #{bert_keyword_extraction_forward.14} parent=0 // pred_check
    _
  $region35: #{bert_keyword_extraction_forward.14} parent=0 // pred_check_branch
    %182 = sbr.rel (0) target = $region37
  $region36: #{bert_keyword_extraction_forward.14} parent=0 // pred_region
    _
  $region37: #{bert_keyword_extraction_forward.14} parent=0 // pred_fallthru
    _
  // Predicated region
  $region38: #{bert_keyword_extraction_forward.14} parent=0 // pred_check
    _
  $region39: #{bert_keyword_extraction_forward.14} parent=0 // pred_check_branch
    %184 = sbr.rel (0) target = $region41
  $region40: #{bert_keyword_extraction_forward.14} parent=0 // pred_region
    _
  $region41: #{bert_keyword_extraction_forward.14} parent=0 // pred_fallthru
    _

// kernel: bert_keyword_extraction_forward.15
$region0: #{bert_keyword_extraction_forward.15}
  #allocation0 [shape = 'u32[]', space=smem, size = 0x4, offset = 0x4, fixed_abs, tag = 'smem constant byte address 0x4 - core index']
  #allocation1 [shape = 'u32[144,128]{1,0:T(1,128)}', space=vmem, size = 0x12000, scoped, tag = 'internal scratch']
  #allocation2 [shape = 'f32[16,64]{1,0:T(8,128)}', space=vmem, size = 0x2000, scoped, tag = 'scratch operand']
  %s0 = inlined_call_operand.vmem [shape: bf16[16,32], index: 0, kind: input, shape index: {}]
  %s1 = inlined_call_operand.vmem [shape: bf16[32,64], index: 1, kind: input, shape index: {}]
  %s2 = inlined_call_operand.vmem [shape: f32[1,64], index: 2, kind: input, shape index: {}]
  %s3 = inlined_call_operand.vmem [shape: bf16[16,64], index: 3, kind: output, shape index: {}]
  %s4 = sld [smem:[#allocation0]]
  $region30: #{bert_keyword_extraction_forward.15} parent=0
    _
  %s6 = ssub.s32 1, %s4
  %s7 = scalar_select 0, %s6, %s4
  // Predicated region
  $region2: #{bert_keyword_extraction_forward.15} parent=0 // pred_check
    _
  $region3: #{bert_keyword_extraction_forward.15} parent=0 // pred_check_branch
    %9 = sbr.rel (0) target = $region5
  $region4: #{bert_keyword_extraction_forward.15} parent=0 // pred_region
    _
  $region5: #{bert_keyword_extraction_forward.15} parent=0 // pred_fallthru
    _
  // Predicated region
  $region6: #{bert_keyword_extraction_forward.15} parent=0 // pred_check
    _
  $region7: #{bert_keyword_extraction_forward.15} parent=0 // pred_check_branch
    %11 = sbr.rel (0) target = $region9
  $region8: #{bert_keyword_extraction_forward.15} parent=0 // pred_region
    _
  $region9: #{bert_keyword_extraction_forward.15} parent=0 // pred_fallthru
    _
  // Predicated region
  $region10: #{bert_keyword_extraction_forward.15} parent=0 // pred_check
    _
  $region11: #{bert_keyword_extraction_forward.15} parent=0 // pred_check_branch
    %13 = sbr.rel (0) target = $region13
  $region12: #{bert_keyword_extraction_forward.15} parent=0 // pred_region
    _
  $region13: #{bert_keyword_extraction_forward.15} parent=0 // pred_fallthru
    _
  %p15 = scmp.eq.s32.totalorder 0, 0
  // Predicated region
  $region14: #{bert_keyword_extraction_forward.15} parent=0 // pred_check
    %p16 = pneg %p15
  $region15: #{bert_keyword_extraction_forward.15} parent=0 // pred_check_branch
    %18 = sbr.rel (%p16) target = $region17
  $region16: #{bert_keyword_extraction_forward.15} parent=0 // pred_region
    %vm19 = vcmask 523264
    %20 = vst.msk [vmem:[#allocation2] sm:$0xff] %vm19, 0.0
    %21 = vst.msk [vmem:[#allocation2 + $0x8] sm:$0xff] %vm19, 0.0
  $region17: #{bert_keyword_extraction_forward.15} parent=0 // pred_fallthru
    _
  %v22 = vld [vmem:[#allocation2] sm:$0xff]
  %v23 = vld [vmem:[#allocation2 + $0x8] sm:$0xff]
  %v24 = vld [vmem:[%s0] sm:$0xf]
  %v25 = vld [vmem:[%s0 + $0x4] sm:$0xf]
  %v26 = vld [vmem:[%s1] sm:$0xf]
  %v27 = vld [vmem:[%s1 + $0x4] sm:$0xf]
  %v28 = vld [vmem:[%s1 + $0x8] sm:$0xf]
  %v29 = vld [vmem:[%s1 + $0xc] sm:$0xf]
  %v32 = vunpack.c.l.b16 %v24
  %v33 = vunpack.c.l.b16 %v25
  %v34 = vpack.c.b16 %v33, %v32
  %v39 = vunpack.c.l.b16 %v26
  %v40 = vunpack.c.l.b16 %v27
  %v41 = vunpack.c.l.b16 %v28
  %v42 = vunpack.c.l.b16 %v29
  %v43 = vpack.c.b16 %v40, %v39
  %v44 = vpack.c.b16 %v42, %v41
  %vm47 = vcmask 261120
  %v49 = vsel %vm47, %v34, 0
  %51 = vmatprep.subr.bf16.mxu0 0
  %52 = vmatpush1.bf16.msra.mxu0 %v43
  %53 = vmatprep.subr.bf16.mxu0 0
  %54 = vmatpush1.bf16.msra.mxu0 %v44
  %55 = vmatprep.subr.bf16.mxu0 0
  %56 = vmatpush1.bf16.msra.mxu0 0
  %57 = vmatprep.subr.bf16.mxu0 0
  %58 = vmatpush1.bf16.msra.mxu0 0
  %59 = vmatprep.subr.bf16.mxu0 0
  %60 = vmatpush1.bf16.msra.mxu0 0
  %61 = vmatprep.subr.bf16.mxu0 0
  %62 = vmatpush1.bf16.msra.mxu0 0
  %63 = vmatprep.subr.bf16.mxu0 0
  %64 = vmatpush1.bf16.msra.mxu0 0
  %65 = vmatprep.subr.bf16.mxu0 0
  %66 = vmatpush1.bf16.msra.mxu0 0
  %67 = vmatprep.subr.bf16.mxu0 0
  %68 = vmatpush1.bf16.msra.mxu0 0
  %69 = vmatprep.subr.bf16.mxu0 0
  %70 = vmatpush1.bf16.msra.mxu0 0
  %71 = vmatprep.subr.bf16.mxu0 0
  %72 = vmatpush1.bf16.msra.mxu0 0
  %73 = vmatprep.subr.bf16.mxu0 0
  %74 = vmatpush1.bf16.msra.mxu0 0
  %75 = vmatprep.subr.bf16.mxu0 0
  %76 = vmatpush1.bf16.msra.mxu0 0
  %77 = vmatprep.subr.bf16.mxu0 0
  %78 = vmatpush1.bf16.msra.mxu0 0
  %79 = vmatprep.subr.bf16.mxu0 0
  %80 = vmatpush1.bf16.msra.mxu0 0
  %81 = vmatprep.subr.bf16.mxu0 0
  %82 = vmatpush1.bf16.msra.mxu0 0
  %83 = vmatprep.mubr.bf16.mxu0 0
  %84 = vmatmul.mubr.bf16.gmra.mrb[0].mxu0 %v49
  %v85 = vpop.f32.mrb[0].mxu0
  %v86 = vadd.f32 0.0, %v85
  %v87 = vpop.f32.mrb[0].mxu0
  %v88 = vpop.f32.mrb[0].mxu0
  %v89 = vadd.f32 0.0, %v88
  %v90 = vpop.f32.mrb[0].mxu0
  %91 = vdwg.mxu0
  %v92 = vadd.f32 %v22, %v86
  %v93 = vadd.f32 %v23, %v89
  %vm94 = vcmask 523264
  %95 = vst.msk [vmem:[#allocation2] sm:$0xff] %vm94, %v92
  %96 = vst.msk [vmem:[#allocation2 + $0x8] sm:$0xff] %vm94, %v93
  // Predicated region
  $region18: #{bert_keyword_extraction_forward.15} parent=0 // pred_check
    %p97 = pneg %p15
  $region19: #{bert_keyword_extraction_forward.15} parent=0 // pred_check_branch
    %99 = sbr.rel (%p97) target = $region21
  $region20: #{bert_keyword_extraction_forward.15} parent=0 // pred_region
    %v100 = vld [vmem:[#allocation2] sm:$0xff]
    %v101 = vld [vmem:[#allocation2 + $0x8] sm:$0xff]
    %v102 = vld [vmem:[%s2] sm:$0x1]
    %v104 = vlaneseq
    %v105 = vshrl.u32 %v104, 7
    %v106 = vsub.s32 0, %v105
    %v107 = vrot.slane %v102, %v106
    %v109 = vadd.f32 %v100, %v107
    %v110 = vadd.f32 %v101, %v107
    %v111 = vmul.f32 %v109, 0.5
    %v112 = vmul.f32 %v110, 0.5
    %v113 = vmul.f32 %v109, 0.044715
    %v114 = vmul.f32 %v110, 0.044715
    %v115 = vmul.f32 %v113, %v109
    %v116 = vmul.f32 %v114, %v110
    %v117 = vmul.f32 %v115, %v109
    %v118 = vmul.f32 %v116, %v110
    %v119 = vadd.f32 %v109, %v117
    %v120 = vadd.f32 %v110, %v118
    %v121 = vmul.f32 %v119, 0.7978846
    %v122 = vmul.f32 %v120, 0.7978846
    %v123 = vtanh.pop %v121
    %v124 = vtanh.pop %v122
    %v125 = vadd.f32 %v123, 1.0
    %v126 = vadd.f32 %v124, 1.0
    %v127 = vmul.f32 %v111, %v125
    %v128 = vmul.f32 %v112, %v126
    %v129 = vpack.c.bf16 %v128, %v127
    %v131 = vunpack.c.l.b16 %v129
    %v132 = vunpack.c.h.b16 %v129
    %v133 = vpack.c.b16 %v131, %v131
    %v134 = vpack.c.b16 %v132, %v132
    %vm137 = vcmask 519168
    %138 = vst.msk [vmem:[%s3] sm:$0xf] %vm137, %v133
    %139 = vst.msk [vmem:[%s3 + $0x4] sm:$0xf] %vm137, %v134
  $region21: #{bert_keyword_extraction_forward.15} parent=0 // pred_fallthru
    _
  // Predicated region
  $region22: #{bert_keyword_extraction_forward.15} parent=0 // pred_check
    _
  $region23: #{bert_keyword_extraction_forward.15} parent=0 // pred_check_branch
    %141 = sbr.rel (0) target = $region25
  $region24: #{bert_keyword_extraction_forward.15} parent=0 // pred_region
    _
  $region25: #{bert_keyword_extraction_forward.15} parent=0 // pred_fallthru
    _
  // Predicated region
  $region26: #{bert_keyword_extraction_forward.15} parent=0 // pred_check
    _
  $region27: #{bert_keyword_extraction_forward.15} parent=0 // pred_check_branch
    %143 = sbr.rel (0) target = $region29
  $region28: #{bert_keyword_extraction_forward.15} parent=0 // pred_region
    _
  $region29: #{bert_keyword_extraction_forward.15} parent=0 // pred_fallthru
    _

// kernel: bert_keyword_extraction_forward.16
$region0: #{bert_keyword_extraction_forward.16}
  #allocation0 [shape = 'u32[]', space=smem, size = 0x4, offset = 0x4, fixed_abs, tag = 'smem constant byte address 0x4 - core index']
  #allocation1 [shape = 'u32[144,128]{1,0:T(1,128)}', space=vmem, size = 0x12000, scoped, tag = 'internal scratch']
  #allocation2 [shape = 'f32[16,32]{1,0:T(8,128)}', space=vmem, size = 0x2000, scoped, tag = 'scratch operand']
  %s0 = inlined_call_operand.vmem [shape: bf16[16,64], index: 0, kind: input, shape index: {}]
  %s1 = inlined_call_operand.vmem [shape: bf16[64,32], index: 1, kind: input, shape index: {}]
  %s2 = inlined_call_operand.vmem [shape: f32[1,32], index: 2, kind: input, shape index: {}]
  %s3 = inlined_call_operand.vmem [shape: bf16[16,32], index: 3, kind: input, shape index: {}]
  %s4 = inlined_call_operand.vmem [shape: f32[1,32], index: 4, kind: input, shape index: {}]
  %s5 = inlined_call_operand.vmem [shape: f32[1,32], index: 5, kind: input, shape index: {}]
  %s6 = inlined_call_operand.vmem [shape: bf16[16,32], index: 6, kind: output, shape index: {}]
  %s7 = sld [smem:[#allocation0]]
  $region42: #{bert_keyword_extraction_forward.16} parent=0
    _
  %s9 = ssub.s32 1, %s7
  %s10 = scalar_select 0, %s9, %s7
  // Predicated region
  $region2: #{bert_keyword_extraction_forward.16} parent=0 // pred_check
    _
  $region3: #{bert_keyword_extraction_forward.16} parent=0 // pred_check_branch
    %12 = sbr.rel (0) target = $region5
  $region4: #{bert_keyword_extraction_forward.16} parent=0 // pred_region
    _
  $region5: #{bert_keyword_extraction_forward.16} parent=0 // pred_fallthru
    _
  // Predicated region
  $region6: #{bert_keyword_extraction_forward.16} parent=0 // pred_check
    _
  $region7: #{bert_keyword_extraction_forward.16} parent=0 // pred_check_branch
    %14 = sbr.rel (0) target = $region9
  $region8: #{bert_keyword_extraction_forward.16} parent=0 // pred_region
    _
  $region9: #{bert_keyword_extraction_forward.16} parent=0 // pred_fallthru
    _
  // Predicated region
  $region10: #{bert_keyword_extraction_forward.16} parent=0 // pred_check
    _
  $region11: #{bert_keyword_extraction_forward.16} parent=0 // pred_check_branch
    %16 = sbr.rel (0) target = $region13
  $region12: #{bert_keyword_extraction_forward.16} parent=0 // pred_region
    _
  $region13: #{bert_keyword_extraction_forward.16} parent=0 // pred_fallthru
    _
  // Predicated region
  $region14: #{bert_keyword_extraction_forward.16} parent=0 // pred_check
    _
  $region15: #{bert_keyword_extraction_forward.16} parent=0 // pred_check_branch
    %18 = sbr.rel (0) target = $region17
  $region16: #{bert_keyword_extraction_forward.16} parent=0 // pred_region
    _
  $region17: #{bert_keyword_extraction_forward.16} parent=0 // pred_fallthru
    _
  // Predicated region
  $region18: #{bert_keyword_extraction_forward.16} parent=0 // pred_check
    _
  $region19: #{bert_keyword_extraction_forward.16} parent=0 // pred_check_branch
    %20 = sbr.rel (0) target = $region21
  $region20: #{bert_keyword_extraction_forward.16} parent=0 // pred_region
    _
  $region21: #{bert_keyword_extraction_forward.16} parent=0 // pred_fallthru
    _
  // Predicated region
  $region22: #{bert_keyword_extraction_forward.16} parent=0 // pred_check
    _
  $region23: #{bert_keyword_extraction_forward.16} parent=0 // pred_check_branch
    %22 = sbr.rel (0) target = $region25
  $region24: #{bert_keyword_extraction_forward.16} parent=0 // pred_region
    _
  $region25: #{bert_keyword_extraction_forward.16} parent=0 // pred_fallthru
    _
  %p24 = scmp.eq.s32.totalorder 0, 0
  // Predicated region
  $region26: #{bert_keyword_extraction_forward.16} parent=0 // pred_check
    %p25 = pneg %p24
  $region27: #{bert_keyword_extraction_forward.16} parent=0 // pred_check_branch
    %27 = sbr.rel (%p25) target = $region29
  $region28: #{bert_keyword_extraction_forward.16} parent=0 // pred_region
    %vm28 = vcmask 261120
    %29 = vst.msk [vmem:[#allocation2] sm:$0xff] %vm28, 0.0
    %30 = vst.msk [vmem:[#allocation2 + $0x8] sm:$0xff] %vm28, 0.0
  $region29: #{bert_keyword_extraction_forward.16} parent=0 // pred_fallthru
    _
  %v31 = vld [vmem:[#allocation2] sm:$0xff]
  %v32 = vld [vmem:[#allocation2 + $0x8] sm:$0xff]
  %v33 = vld [vmem:[%s0] sm:$0xf]
  %v34 = vld [vmem:[%s0 + $0x4] sm:$0xf]
  %v35 = vld [vmem:[%s1] sm:$0xf]
  %v36 = vld [vmem:[%s1 + $0x4] sm:$0xf]
  %v37 = vld [vmem:[%s1 + $0x8] sm:$0xf]
  %v38 = vld [vmem:[%s1 + $0xc] sm:$0xf]
  %v39 = vld [vmem:[%s1 + $0x10] sm:$0xf]
  %v40 = vld [vmem:[%s1 + $0x14] sm:$0xf]
  %v41 = vld [vmem:[%s1 + $0x18] sm:$0xf]
  %v42 = vld [vmem:[%s1 + $0x1c] sm:$0xf]
  %v45 = vunpack.c.l.b16 %v33
  %v46 = vunpack.c.l.b16 %v34
  %v47 = vpack.c.b16 %v46, %v45
  %v56 = vunpack.c.l.b16 %v35
  %v57 = vunpack.c.l.b16 %v36
  %v58 = vunpack.c.l.b16 %v37
  %v59 = vunpack.c.l.b16 %v38
  %v60 = vunpack.c.l.b16 %v39
  %v61 = vunpack.c.l.b16 %v40
  %v62 = vunpack.c.l.b16 %v41
  %v63 = vunpack.c.l.b16 %v42
  %v64 = vpack.c.b16 %v57, %v56
  %v65 = vpack.c.b16 %v59, %v58
  %v66 = vpack.c.b16 %v61, %v60
  %v67 = vpack.c.b16 %v63, %v62
  %vm72 = vcmask 523264
  %v74 = vsel %vm72, %v47, 0
  %76 = vmatprep.subr.bf16.mxu0 0
  %77 = vmatpush1.bf16.msra.mxu0 %v64
  %78 = vmatprep.subr.bf16.mxu0 0
  %79 = vmatpush1.bf16.msra.mxu0 %v65
  %80 = vmatprep.subr.bf16.mxu0 0
  %81 = vmatpush1.bf16.msra.mxu0 %v66
  %82 = vmatprep.subr.bf16.mxu0 0
  %83 = vmatpush1.bf16.msra.mxu0 %v67
  %84 = vmatprep.subr.bf16.mxu0 0
  %85 = vmatpush1.bf16.msra.mxu0 0
  %86 = vmatprep.subr.bf16.mxu0 0
  %87 = vmatpush1.bf16.msra.mxu0 0
  %88 = vmatprep.subr.bf16.mxu0 0
  %89 = vmatpush1.bf16.msra.mxu0 0
  %90 = vmatprep.subr.bf16.mxu0 0
  %91 = vmatpush1.bf16.msra.mxu0 0
  %92 = vmatprep.subr.bf16.mxu0 0
  %93 = vmatpush1.bf16.msra.mxu0 0
  %94 = vmatprep.subr.bf16.mxu0 0
  %95 = vmatpush1.bf16.msra.mxu0 0
  %96 = vmatprep.subr.bf16.mxu0 0
  %97 = vmatpush1.bf16.msra.mxu0 0
  %98 = vmatprep.subr.bf16.mxu0 0
  %99 = vmatpush1.bf16.msra.mxu0 0
  %100 = vmatprep.subr.bf16.mxu0 0
  %101 = vmatpush1.bf16.msra.mxu0 0
  %102 = vmatprep.subr.bf16.mxu0 0
  %103 = vmatpush1.bf16.msra.mxu0 0
  %104 = vmatprep.subr.bf16.mxu0 0
  %105 = vmatpush1.bf16.msra.mxu0 0
  %106 = vmatprep.subr.bf16.mxu0 0
  %107 = vmatpush1.bf16.msra.mxu0 0
  %108 = vmatprep.mubr.bf16.mxu0 0
  %109 = vmatmul.mubr.bf16.gmra.mrb[0].mxu0 %v74
  %v110 = vpop.f32.mrb[0].mxu0
  %v111 = vadd.f32 0.0, %v110
  %v112 = vpop.f32.mrb[0].mxu0
  %v113 = vpop.f32.mrb[0].mxu0
  %v114 = vadd.f32 0.0, %v113
  %v115 = vpop.f32.mrb[0].mxu0
  %116 = vdwg.mxu0
  %v117 = vadd.f32 %v31, %v111
  %v118 = vadd.f32 %v32, %v114
  %vm119 = vcmask 261120
  %120 = vst.msk [vmem:[#allocation2] sm:$0xff] %vm119, %v117
  %121 = vst.msk [vmem:[#allocation2 + $0x8] sm:$0xff] %vm119, %v118
  // Predicated region
  $region30: #{bert_keyword_extraction_forward.16} parent=0 // pred_check
    %p122 = pneg %p24
  $region31: #{bert_keyword_extraction_forward.16} parent=0 // pred_check_branch
    %124 = sbr.rel (%p122) target = $region33
  $region32: #{bert_keyword_extraction_forward.16} parent=0 // pred_region
    %v125 = vld [vmem:[#allocation2] sm:$0xff]
    %v126 = vld [vmem:[#allocation2 + $0x8] sm:$0xff]
    %v127 = vld [vmem:[%s2] sm:$0x1]
    %v129 = vlaneseq
    %v130 = vshrl.u32 %v129, 7
    %v131 = vsub.s32 0, %v130
    %v132 = vrot.slane %v127, %v131
    %v134 = vadd.f32 %v125, %v132
    %v135 = vadd.f32 %v126, %v132
    %v136 = vld [vmem:[%s3] sm:$0xf]
    %v137 = vld [vmem:[%s3 + $0x4] sm:$0xf]
    %v138 = vunpack.c.l.bf16 %v136
    %v139 = vunpack.c.l.bf16 %v137
    %v140 = vadd.f32 %v134, %v138
    %v141 = vadd.f32 %v135, %v139
    %v142 = vsel %vm119, %v140, 0.0
    %143 = vadd.xlane.f32.xlu0 %v142
    %v144 = vpop.xlane.xlu0 %143
    %v145 = vsel %vm119, %v141, 0.0
    %146 = vadd.xlane.f32.xlu0 %v145
    %v147 = vpop.xlane.xlu0 %146
    %v148 = vrcp.pop 32.0
    %v149 = vmul.f32 %v144, %v148
    %v150 = vmul.f32 %v147, %v148
    %v151 = vsub.f32 %v140, %v149
    %v152 = vsub.f32 %v141, %v150
    %v153 = vmul.f32 %v151, %v151
    %v154 = vmul.f32 %v152, %v152
    %v155 = vsel %vm119, %v153, 0.0
    %156 = vadd.xlane.f32.xlu0 %v155
    %v157 = vpop.xlane.xlu0 %156
    %v158 = vsel %vm119, %v154, 0.0
    %159 = vadd.xlane.f32.xlu0 %v158
    %v160 = vpop.xlane.xlu0 %159
    %v161 = vmul.f32 %v157, %v148
    %v162 = vmul.f32 %v160, %v148
    %v163 = vadd.f32 %v161, 1e-12
    %v164 = vadd.f32 %v162, 1e-12
    %v165 = vrsqrt.pop %v163
    %v166 = vrsqrt.pop %v164
    %v167 = vmul.f32 %v151, %v165
    %v168 = vmul.f32 %v152, %v166
    %v169 = vld [vmem:[%s4] sm:$0x1]
    %v171 = vlaneseq
    %v172 = vshrl.u32 %v171, 7
    %v173 = vsub.s32 0, %v172
    %v174 = vrot.slane %v169, %v173
    %v176 = vmul.f32 %v167, %v174
    %v177 = vmul.f32 %v168, %v174
    %v178 = vld [vmem:[%s5] sm:$0x1]
    %v180 = vlaneseq
    %v181 = vshrl.u32 %v180, 7
    %v182 = vsub.s32 0, %v181
    %v183 = vrot.slane %v178, %v182
    %v185 = vadd.f32 %v176, %v183
    %v186 = vadd.f32 %v177, %v183
    %v187 = vpack.c.bf16 %v186, %v185
    %v189 = vunpack.c.l.b16 %v187
    %v190 = vunpack.c.h.b16 %v187
    %v191 = vpack.c.b16 %v189, %v189
    %v192 = vpack.c.b16 %v190, %v190
    %vm195 = vcmask 257024
    %196 = vst.msk [vmem:[%s6] sm:$0xf] %vm195, %v191
    %197 = vst.msk [vmem:[%s6 + $0x4] sm:$0xf] %vm195, %v192
  $region33: #{bert_keyword_extraction_forward.16} parent=0 // pred_fallthru
    _
  // Predicated region
  $region34: #{bert_keyword_extraction_forward.16} parent=0 // pred_check
    _
  $region35: #{bert_keyword_extraction_forward.16} parent=0 // pred_check_branch
    %199 = sbr.rel (0) target = $region37
  $region36: #{bert_keyword_extraction_forward.16} parent=0 // pred_region
    _
  $region37: #{bert_keyword_extraction_forward.16} parent=0 // pred_fallthru
    _
  // Predicated region
  $region38: #{bert_keyword_extraction_forward.16} parent=0 // pred_check
    _
  $region39: #{bert_keyword_extraction_forward.16} parent=0 // pred_check_branch
    %201 = sbr.rel (0) target = $region41
  $region40: #{bert_keyword_extraction_forward.16} parent=0 // pred_region
    _
  $region41: #{bert_keyword_extraction_forward.16} parent=0 // pred_fallthru
    _

</llo_original>
